<compile_context>
chip_gen: v5e
topology: v5e:2x2
jax: 0.10.0
libtpu: 0.0.40
codegen_flags: <defaults>
</compile_context>

<pallas_src>
import functools

import jax
import jax.numpy as jnp
from jax.experimental import pallas as pl
from jax.experimental.pallas import tpu as pltpu


def _vmem_limit_bytes():
    """~85% of the detected chip's physical VMEM (fallback: 64 MiB)."""
    try:
        cap = int(pltpu.get_tpu_info().vmem_capacity_bytes)
    except Exception:
        cap = 64 * 1024 * 1024
    return max(32 * 1024 * 1024, int(cap * 0.85))


def _pick_heads_per_step(nhead, head_dim, target_width=256):
    """Largest divisor G of nhead with G*head_dim <= target_width."""
    best = 1
    for g in range(1, nhead + 1):
        if nhead % g == 0 and g * head_dim <= target_width:
            best = g
    return best


def _layer_norm_f32(x, gamma, beta):
    # two-pass LayerNorm (mean, then centred variance) - matches PyTorch and
    # avoids the E[x^2]-E[x]^2 cancellation of the single-pass formulation.
    mu = jnp.mean(x, axis=-1, keepdims=True)
    xc = x - mu
    var = jnp.mean(xc * xc, axis=-1, keepdims=True)
    return xc * jax.lax.rsqrt(var + 1e-5) * gamma + beta


def encoder_layer_kernel(
    x_ref, mask_ref,
    wq_ref, wk_ref, wv_ref, bqkv_ref, wo_ref,
    w1_ref, b1_ref, w2_ref, ln_ref,
    out_ref, *rest,
    nhead, heads_per_step, n_groups, need_weights,
):
    if need_weights:
        attn_ref, xb_scr, acc_ref, p_acc = rest
    else:
        attn_ref = p_acc = None
        xb_scr, acc_ref = rest

    g = pl.program_id(1)
    L = x_ref.shape[1]
    G = heads_per_step
    GD = wq_ref.shape[2]
    Dh = GD // G

    @pl.when(g == 0)
    def _init():
        # hoisted bf16 cast: done once per batch element, reused for every
        # head group (and never redone for the FFN - y is cast fresh anyway).
        xb_scr[...] = x_ref[0].astype(jnp.bfloat16)
        acc_ref[...] = jnp.zeros_like(acc_ref)
        if need_weights:
            p_acc[...] = jnp.zeros_like(p_acc)

    xb = xb_scr[...]                               # (L, E) bf16
    mask_add = mask_ref[0]                         # (1, L) f32 additive mask

    # --- wide projections for the whole head group (bf16 MXU, f32 acc).
    #     1/sqrt(Dh) is already folded into Wq / bq by the wrapper.
    bqkv = bqkv_ref[0]                             # (3, G*Dh) f32
    q = jnp.dot(xb, wq_ref[0], preferred_element_type=jnp.float32) + bqkv[0:1]
    k = jnp.dot(xb, wk_ref[0], preferred_element_type=jnp.float32) + bqkv[1:2]
    v = jnp.dot(xb, wv_ref[0], preferred_element_type=jnp.float32) + bqkv[2:3]

    qh = q.reshape(L, G, Dh).astype(jnp.bfloat16)
    kh = k.reshape(L, G, Dh).astype(jnp.bfloat16)
    vh = v.reshape(L, G, Dh).astype(jnp.bfloat16)

    # --- batched NT score matmul over the G heads of this group.
    s = jnp.einsum('qgd,kgd->gqk', qh, kh,
                   preferred_element_type=jnp.float32)     # (G, L, L)
    s = s + mask_add[None]                                 # key-padding mask

    # --- softmax in f32; exact reciprocal (feeds the returned weights too).
    s = s - jnp.max(s, axis=-1, keepdims=True)
    p = jnp.exp(s)
    p = p * pl.reciprocal(jnp.sum(p, axis=-1, keepdims=True))

    # --- per-group context and its slice of the output projection.
    ctx = jnp.einsum('gqk,kgd->qgd', p.astype(jnp.bfloat16), vh,
                     preferred_element_type=jnp.float32)   # (L, G, Dh)
    ctx = ctx.reshape(L, GD)
    # wide (K = G*Dh) out-projection contraction, accumulated over head groups
    acc_ref[...] += jnp.dot(ctx.astype(jnp.bfloat16), wo_ref[0],
                            preferred_element_type=jnp.float32)

    if need_weights:
        # accumulate the head-summed probs in VMEM; the (lane-dense) output
        # store happens exactly once, at the last head group.
        p_acc[:, 0:L] += jnp.sum(p, axis=0)

    # --- last head group: out-proj bias, residual+norm1, FFN, residual+norm2.
    @pl.when(g == n_groups - 1)
    def _finalize():
        lnp = ln_ref[...]                  # (6, E): g1, be1, g2, be2, bo, b2
        x = x_ref[0]                       # (L, E) f32 residual stream

        attn_out = acc_ref[...] + lnp[4:5]                  # + bo
        y = _layer_norm_f32(x + attn_out, lnp[0:1], lnp[1:2])

        h1 = jnp.dot(y.astype(jnp.bfloat16), w1_ref[...],
                     preferred_element_type=jnp.float32) + b1_ref[...]
        h1 = jnp.maximum(h1, 0.0)
        ffn = jnp.dot(h1.astype(jnp.bfloat16), w2_ref[...],
                      preferred_element_type=jnp.float32) + lnp[5:6]  # + b2

        out_ref[0] = _layer_norm_f32(y + ffn, lnp[2:3], lnp[3:4])
        if need_weights:
            attn_ref[0] = (p_acc[...] * (1.0 / nhead)).astype(attn_ref.dtype)


def transformer_encoder_layer(src, key_padding_mask, params, nhead,
                              need_weights=True, weights_dtype=jnp.float32):
    """src: (L, N, E) f32; key_padding_mask: (N, L) bool (True = padded).

    Returns (out (L, N, E), attn_weights (N, L, L) or None), matching the
    PyTorch module's forward (eval-mode dropout).
    """
    L, N, E = src.shape
    assert E % nhead == 0
    Dh = E // nhead
    F = params["w1t"].shape[1]
    Lp = ((L + 127) // 128) * 128            # lane-dense attn-weight output

    G = _pick_heads_per_step(nhead, Dh)      # heads per grid step
    NG = nhead // G
    GD = G * Dh

    x = jnp.transpose(src, (1, 0, 2)).astype(jnp.float32)           # (N, L, E)
    mask_add = jnp.where(key_padding_mask, -1e9, 0.0)
    mask_add = mask_add.astype(jnp.float32).reshape(N, 1, L)

    bf16 = jnp.bfloat16
    scale = 1.0 / float(Dh) ** 0.5

    def split_in(wt):   # (E, E) = W^T, head-major out-features -> (NG, E, GD)
        return jnp.transpose(wt.reshape(E, NG, GD), (1, 0, 2)).astype(bf16)

    wq = split_in(params["wqt"] * scale)     # fold 1/sqrt(Dh) into Wq
    wk = split_in(params["wkt"])
    wv = split_in(params["wvt"])
    wo = params["wot"].reshape(NG, GD, E).astype(bf16)              # (NG,GD,E)

    b_all = jnp.stack([params["bq"][0] * scale,                     # (3, E)
                       params["bk"][0], params["bv"][0]], axis=0)
    b_qkv = jnp.transpose(b_all.reshape(3, NG, GD), (1, 0, 2))      # (NG,3,GD)
    b_qkv = b_qkv.astype(jnp.float32)

    ln_pack = jnp.concatenate(                                      # (6, E)
        [params["g1"], params["be1"], params["g2"], params["be2"],
         params["bo"], params["b2"]], axis=0).astype(jnp.float32)

    w1 = params["w1t"].astype(bf16)
    w2 = params["w2t"].astype(bf16)
    b1 = params["b1"].astype(jnp.float32)

    kernel = functools.partial(encoder_layer_kernel, nhead=nhead,
                               heads_per_step=G, n_groups=NG,
                               need_weights=need_weights)

    def batch_spec(block):
        return pl.BlockSpec(block, lambda b, g: (b, 0, 0))

    def group_spec(block):
        return pl.BlockSpec(block, lambda b, g: (g, 0, 0))

    def const_spec(block):
        return pl.BlockSpec(block, lambda b, g: (0,) * len(block))

    in_specs = [
        batch_spec((1, L, E)),     # x (f32 residual stream)
        batch_spec((1, 1, L)),     # additive key-padding mask
        group_spec((1, E, GD)),    # Wq^T (scaled), per head group
        group_spec((1, E, GD)),    # Wk^T
        group_spec((1, E, GD)),    # Wv^T
        group_spec((1, 3, GD)),    # packed q/k/v biases for the group
        group_spec((1, GD, E)),    # Wo^T rows for the group
        const_spec((E, F)),        # W1^T
        const_spec((1, F)),        # b1
        const_spec((F, E)),        # W2^T
        const_spec((6, E)),        # packed [g1, be1, g2, be2, bo, b2]
    ]

    scratch = [pltpu.VMEM((L, E), bf16),          # hoisted bf16 activations
               pltpu.VMEM((L, E), jnp.float32)]   # out-proj accumulator
    if need_weights:
        out_shape = (jax.ShapeDtypeStruct((N, L, E), jnp.float32),
                     jax.ShapeDtypeStruct((N, L, Lp), weights_dtype))
        out_specs = (batch_spec((1, L, E)), batch_spec((1, L, Lp)))
        scratch = scratch + [pltpu.VMEM((L, Lp), jnp.float32)]  # prob accum
    else:
        out_shape = jax.ShapeDtypeStruct((N, L, E), jnp.float32)
        out_specs = batch_spec((1, L, E))

    result = pl.pallas_call(
        kernel,
        out_shape=out_shape,
        grid=(N, NG),
        in_specs=in_specs,
        out_specs=out_specs,
        scratch_shapes=scratch,
        compiler_params=pltpu.CompilerParams(
            dimension_semantics=("parallel", "arbitrary"),
            vmem_limit_bytes=_vmem_limit_bytes()),
    )(x, mask_add, wq, wk, wv, b_qkv, wo, w1, b1, w2, ln_pack)

    if need_weights:
        out, attn = result
        return jnp.transpose(out, (1, 0, 2)), attn[:, :, :L]
    return jnp.transpose(result, (1, 0, 2)), None


def reference_layer(src, key_padding_mask, params, nhead):
    """Pure-JAX f32 reference of the PyTorch forward (eval mode)."""
    L, N, E = src.shape
    Dh = E // nhead
    x = jnp.transpose(src, (1, 0, 2)).astype(jnp.float32)   # (N, L, E)

    def ln(t, g, b):
        mu = jnp.mean(t, axis=-1, keepdims=True)
        var = jnp.mean((t - mu) ** 2, axis=-1, keepdims=True)
        return (t - mu) / jnp.sqrt(var + 1e-5) * g + b

    q = x @ params["wqt"] + params["bq"]
    k = x @ params["wkt"] + params["bk"]
    v = x @ params["wvt"] + params["bv"]
    qh = q.reshape(N, L, nhead, Dh).transpose(0, 2, 1, 3)
    kh = k.reshape(N, L, nhead, Dh).transpose(0, 2, 1, 3)
    vh = v.reshape(N, L, nhead, Dh).transpose(0, 2, 1, 3)
    s = jnp.einsum("nhqd,nhkd->nhqk", qh, kh) / (float(Dh) ** 0.5)
    s = s + jnp.where(key_padding_mask, -1e9, 0.0)[:, None, None, :]
    p = jax.nn.softmax(s, axis=-1)
    ctx = jnp.einsum("nhqk,nhkd->nhqd", p, vh)
    ctx = ctx.transpose(0, 2, 1, 3).reshape(N, L, E)
    attn_out = ctx @ params["wot"] + params["bo"]
    y = ln(x + attn_out, params["g1"], params["be1"])
    h1 = jnp.maximum(y @ params["w1t"] + params["b1"], 0.0)
    z = ln(y + h1 @ params["w2t"] + params["b2"], params["g2"], params["be2"])
    return jnp.transpose(z, (1, 0, 2)), jnp.mean(p, axis=1)


def init_params(key, embed_dim, dim_feedforward):
    """Synthetic parameters; projection weights stored pre-transposed
    (in_features, out_features) so the kernel right-multiplies."""
    E, F = embed_dim, dim_feedforward
    ks = jax.random.split(key, 6)
    s = 0.05
    return dict(
        wqt=jax.random.normal(ks[0], (E, E), jnp.float32) * s,
        wkt=jax.random.normal(ks[1], (E, E), jnp.float32) * s,
        wvt=jax.random.normal(ks[2], (E, E), jnp.float32) * s,
        bq=jnp.zeros((1, E), jnp.float32),
        bk=jnp.zeros((1, E), jnp.float32),
        bv=jnp.full((1, E), 0.01, jnp.float32),
        wot=jax.random.normal(ks[3], (E, E), jnp.float32) * s,
        bo=jnp.full((1, E), 0.02, jnp.float32),
        w1t=jax.random.normal(ks[4], (E, F), jnp.float32) * s,
        b1=jnp.full((1, F), 0.01, jnp.float32),
        w2t=jax.random.normal(ks[5], (F, E), jnp.float32) * s,
        b2=jnp.full((1, E), 0.02, jnp.float32),
        g1=jnp.ones((1, E), jnp.float32),
        be1=jnp.zeros((1, E), jnp.float32),
        g2=jnp.ones((1, E), jnp.float32),
        be2=jnp.zeros((1, E), jnp.float32),
    )


if __name__ == "__main__":
    # Small shapes consistent with the module (embed_dim divisible by nhead=4).
    embed_dim, nhead, dim_feedforward = 32, 4, 64
    seq_len, batch = 8, 2

    root = jax.random.PRNGKey(0)
    k_params, k_src = jax.random.split(root)

    params = init_params(k_params, embed_dim, dim_feedforward)
    src = jax.random.normal(k_src, (seq_len, batch, embed_dim), jnp.float32)
    # mask the last two key positions of every batch element (True = padded)
    key_padding_mask = jnp.zeros((batch, seq_len), jnp.bool_).at[:, -2:].set(True)

    out, attn = transformer_encoder_layer(src, key_padding_mask, params, nhead)
    jax.block_until_ready((out, attn))

    ref_out, ref_attn = reference_layer(src, key_padding_mask, params, nhead)

    assert out.shape == (seq_len, batch, embed_dim)
    assert attn.shape == (batch, seq_len, seq_len)
    assert bool(jnp.all(jnp.isfinite(out)))
    # attention rows sum to ~1, masked key columns are ~0
    assert bool(jnp.allclose(attn.sum(-1), 1.0, atol=1e-2))
    assert bool(jnp.all(attn[:, :, -2:] < 1e-6))
    # matches the pure-JAX f32 reference within bf16 tolerance
    assert bool(jnp.allclose(out, ref_out, atol=5e-2, rtol=5e-2))
    assert bool(jnp.allclose(attn, ref_attn, atol=2e-2, rtol=2e-2))

    # need_weights=False fast path: no attention-weights HBM traffic at all.
    out_nw, attn_nw = transformer_encoder_layer(
        src, key_padding_mask, params, nhead, need_weights=False)
    jax.block_until_ready(out_nw)
    assert attn_nw is None
    assert bool(jnp.allclose(out_nw, out, atol=1e-5, rtol=1e-5))

    print("KERNEL_OK")
</pallas_src>

<mosaic_0001>
module attributes {stable_mosaic.version = 11 : i64} {
  func.func @encoder_layer_kernel(%arg0: i32, %arg1: i32, %arg2: memref<1x8x32xf32, #tpu.memory_space<vmem>>, %arg3: memref<1x1x8xf32, #tpu.memory_space<vmem>>, %arg4: memref<1x32x32xbf16, #tpu.memory_space<vmem>>, %arg5: memref<1x32x32xbf16, #tpu.memory_space<vmem>>, %arg6: memref<1x32x32xbf16, #tpu.memory_space<vmem>>, %arg7: memref<1x3x32xf32, #tpu.memory_space<vmem>>, %arg8: memref<1x32x32xbf16, #tpu.memory_space<vmem>>, %arg9: memref<32x64xbf16, #tpu.memory_space<vmem>>, %arg10: memref<1x64xf32, #tpu.memory_space<vmem>>, %arg11: memref<64x32xbf16, #tpu.memory_space<vmem>>, %arg12: memref<6x32xf32, #tpu.memory_space<vmem>>, %arg13: memref<1x8x32xf32, #tpu.memory_space<vmem>>, %arg14: memref<1x8x128xf32, #tpu.memory_space<vmem>>, %arg15: memref<8x32xbf16, #tpu.memory_space<vmem>>, %arg16: memref<8x32xf32, #tpu.memory_space<vmem>>, %arg17: memref<8x128xf32, #tpu.memory_space<vmem>>) attributes {dimension_semantics = [#tpu.dimension_semantics<parallel>, #tpu.dimension_semantics<arbitrary>], iteration_bounds = array<i64: 2, 1>, scalar_prefetch = 0 : i64, scratch_operands = 3 : i64, tpu.core_type = #tpu.core_type<tc>, window_params = [{transform_indices = @transform_0, window_bounds = array<i64: 1, 8, 32>}, {transform_indices = @transform_1, window_bounds = array<i64: 1, 1, 8>}, {transform_indices = @transform_2, window_bounds = array<i64: 1, 32, 32>}, {transform_indices = @transform_3, window_bounds = array<i64: 1, 32, 32>}, {transform_indices = @transform_4, window_bounds = array<i64: 1, 32, 32>}, {transform_indices = @transform_5, window_bounds = array<i64: 1, 3, 32>}, {transform_indices = @transform_6, window_bounds = array<i64: 1, 32, 32>}, {pipeline_mode = #tpu.pipeline_mode<synchronous>, transform_indices = @transform_7, window_bounds = array<i64: 32, 64>}, {pipeline_mode = #tpu.pipeline_mode<synchronous>, transform_indices = @transform_8, window_bounds = array<i64: 1, 64>}, {pipeline_mode = #tpu.pipeline_mode<synchronous>, transform_indices = @transform_9, window_bounds = array<i64: 64, 32>}, {pipeline_mode = #tpu.pipeline_mode<synchronous>, transform_indices = @transform_10, window_bounds = array<i64: 6, 32>}, {transform_indices = @transform_11, window_bounds = array<i64: 1, 8, 32>}, {transform_indices = @transform_12, window_bounds = array<i64: 1, 8, 128>}]} {
    %c0_i32 = arith.constant 0 : i32
    %0 = arith.cmpi eq, %arg1, %c0_i32 : i32
    %1 = arith.extui %0 : i1 to i32
    %c0_i32_0 = arith.constant 0 : i32
    %2 = arith.cmpi ne, %1, %c0_i32_0 : i32
    scf.if %2 {
      %c0_38 = arith.constant 0 : index
      %c0_39 = arith.constant 0 : index
      %c0_40 = arith.constant 0 : index
      %64 = vector.load %arg2[%c0_38, %c0_39, %c0_40] : memref<1x8x32xf32, #tpu.memory_space<vmem>>, vector<1x8x32xf32>
      %65 = vector.shape_cast %64 : vector<1x8x32xf32> to vector<8x32xf32>
      %66 = arith.truncf %65 : vector<8x32xf32> to vector<8x32xbf16>
      %c0_41 = arith.constant 0 : index
      %c0_42 = arith.constant 0 : index
      %67 = vector.load %arg15[%c0_41, %c0_42] : memref<8x32xbf16, #tpu.memory_space<vmem>>, vector<8x32xbf16>
      tpu.vector_store %arg15[%c0_41, %c0_42], %66 {strides = array<i32>} : memref<8x32xbf16, #tpu.memory_space<vmem>>, vector<8x32xbf16>,
      %cst_43 = arith.constant 0.000000e+00 : f32
      %68 = vector.broadcast %cst_43 : f32 to vector<8x32xf32>
      %c0_44 = arith.constant 0 : index
      %c0_45 = arith.constant 0 : index
      %69 = vector.load %arg16[%c0_44, %c0_45] : memref<8x32xf32, #tpu.memory_space<vmem>>, vector<8x32xf32>
      tpu.vector_store %arg16[%c0_44, %c0_45], %68 {strides = array<i32>} : memref<8x32xf32, #tpu.memory_space<vmem>>, vector<8x32xf32>,
      %cst_46 = arith.constant 0.000000e+00 : f32
      %70 = vector.broadcast %cst_46 : f32 to vector<8x128xf32>
      %c0_47 = arith.constant 0 : index
      %c0_48 = arith.constant 0 : index
      %71 = vector.load %arg17[%c0_47, %c0_48] : memref<8x128xf32, #tpu.memory_space<vmem>>, vector<8x128xf32>
      tpu.vector_store %arg17[%c0_47, %c0_48], %70 {strides = array<i32>} : memref<8x128xf32, #tpu.memory_space<vmem>>, vector<8x128xf32>,
    } else {
    }
    %c0 = arith.constant 0 : index
    %c0_1 = arith.constant 0 : index
    %3 = vector.load %arg15[%c0, %c0_1] : memref<8x32xbf16, #tpu.memory_space<vmem>>, vector<8x32xbf16>
    %c0_2 = arith.constant 0 : index
    %c0_3 = arith.constant 0 : index
    %c0_4 = arith.constant 0 : index
    %4 = vector.load %arg3[%c0_2, %c0_3, %c0_4] : memref<1x1x8xf32, #tpu.memory_space<vmem>>, vector<1x1x8xf32>
    %5 = vector.shape_cast %4 : vector<1x1x8xf32> to vector<1x8xf32>
    %c0_5 = arith.constant 0 : index
    %c0_6 = arith.constant 0 : index
    %c0_7 = arith.constant 0 : index
    %6 = vector.load %arg7[%c0_5, %c0_6, %c0_7] : memref<1x3x32xf32, #tpu.memory_space<vmem>>, vector<1x3x32xf32>
    %7 = vector.shape_cast %6 : vector<1x3x32xf32> to vector<3x32xf32>
    %c0_8 = arith.constant 0 : index
    %c0_9 = arith.constant 0 : index
    %c0_10 = arith.constant 0 : index
    %8 = vector.load %arg4[%c0_8, %c0_9, %c0_10] : memref<1x32x32xbf16, #tpu.memory_space<vmem>>, vector<1x32x32xbf16>
    %9 = vector.shape_cast %8 : vector<1x32x32xbf16> to vector<32x32xbf16>
    %cst = arith.constant dense<0.000000e+00> : vector<8x32xf32>
    %10 = tpu.matmul %3, %9, %cst {dimension_numbers = #tpu.dot_dimension_numbers<[1], [0], [0], [1], [0, 0, 1, 1], [], []>} : vector<8x32xbf16>, vector<32x32xbf16>, vector<8x32xf32> -> vector<8x32xf32>
    %11 = vector.extract_strided_slice %7 {offsets = [0, 0], sizes = [1, 32], strides = [1, 1]} : vector<3x32xf32> to vector<1x32xf32>
    %12 = vector.broadcast %11 : vector<1x32xf32> to vector<8x32xf32>
    %13 = arith.addf %10, %12 : vector<8x32xf32>
    %c0_11 = arith.constant 0 : index
    %c0_12 = arith.constant 0 : index
    %c0_13 = arith.constant 0 : index
    %14 = vector.load %arg5[%c0_11, %c0_12, %c0_13] : memref<1x32x32xbf16, #tpu.memory_space<vmem>>, vector<1x32x32xbf16>
    %15 = vector.shape_cast %14 : vector<1x32x32xbf16> to vector<32x32xbf16>
    %cst_14 = arith.constant dense<0.000000e+00> : vector<8x32xf32>
    %16 = tpu.matmul %3, %15, %cst_14 {dimension_numbers = #tpu.dot_dimension_numbers<[1], [0], [0], [1], [0, 0, 1, 1], [], []>} : vector<8x32xbf16>, vector<32x32xbf16>, vector<8x32xf32> -> vector<8x32xf32>
    %17 = vector.extract_strided_slice %7 {offsets = [1, 0], sizes = [1, 32], strides = [1, 1]} : vector<3x32xf32> to vector<1x32xf32>
    %18 = vector.broadcast %17 : vector<1x32xf32> to vector<8x32xf32>
    %19 = arith.addf %16, %18 : vector<8x32xf32>
    %c0_15 = arith.constant 0 : index
    %c0_16 = arith.constant 0 : index
    %c0_17 = arith.constant 0 : index
    %20 = vector.load %arg6[%c0_15, %c0_16, %c0_17] : memref<1x32x32xbf16, #tpu.memory_space<vmem>>, vector<1x32x32xbf16>
    %21 = vector.shape_cast %20 : vector<1x32x32xbf16> to vector<32x32xbf16>
    %cst_18 = arith.constant dense<0.000000e+00> : vector<8x32xf32>
    %22 = tpu.matmul %3, %21, %cst_18 {dimension_numbers = #tpu.dot_dimension_numbers<[1], [0], [0], [1], [0, 0, 1, 1], [], []>} : vector<8x32xbf16>, vector<32x32xbf16>, vector<8x32xf32> -> vector<8x32xf32>
    %23 = vector.extract_strided_slice %7 {offsets = [2, 0], sizes = [1, 32], strides = [1, 1]} : vector<3x32xf32> to vector<1x32xf32>
    %24 = vector.broadcast %23 : vector<1x32xf32> to vector<8x32xf32>
    %25 = arith.addf %22, %24 : vector<8x32xf32>
    %26 = vector.shape_cast %13 : vector<8x32xf32> to vector<8x4x8xf32>
    %27 = arith.truncf %26 : vector<8x4x8xf32> to vector<8x4x8xbf16>
    %28 = vector.shape_cast %19 : vector<8x32xf32> to vector<8x4x8xf32>
    %29 = arith.truncf %28 : vector<8x4x8xf32> to vector<8x4x8xbf16>
    %30 = vector.shape_cast %25 : vector<8x32xf32> to vector<8x4x8xf32>
    %31 = arith.truncf %30 : vector<8x4x8xf32> to vector<8x4x8xbf16>
    "tpu.trace_start"() <{level = 10 : i32, message = "qgd,kgd->gqk"}> : () -> ()
    %cst_19 = arith.constant dense<0.000000e+00> : vector<4x8x8xf32>
    %32 = tpu.matmul %27, %29, %cst_19 {dimension_numbers = #tpu.dot_dimension_numbers<[2], [2], [0], [0], [0, 1, 0, 0, 1, 0], [1], [1]>} : vector<8x4x8xbf16>, vector<8x4x8xbf16>, vector<4x8x8xf32> -> vector<4x8x8xf32>
    "tpu.trace_stop"() : () -> ()
    %33 = vector.shape_cast %5 : vector<1x8xf32> to vector<1x1x8xf32>
    %34 = vector.broadcast %33 : vector<1x1x8xf32> to vector<4x8x8xf32>
    %35 = arith.addf %32, %34 : vector<4x8x8xf32>
    %cst_20 = arith.constant dense<0xFF800000> : vector<4x8xf32>
    %36 = vector.multi_reduction <maximumf>, %35, %cst_20 [2] : vector<4x8x8xf32> to vector<4x8xf32>
    %37 = vector.shape_cast %36 : vector<4x8xf32> to vector<4x8x1xf32>
    %38 = vector.broadcast %37 : vector<4x8x1xf32> to vector<4x8x8xf32>
    %39 = arith.subf %35, %38 : vector<4x8x8xf32>
    %40 = math.exp %39 : vector<4x8x8xf32>
    %cst_21 = arith.constant dense<0.000000e+00> : vector<4x8xf32>
    %41 = vector.multi_reduction <add>, %40, %cst_21 [2] : vector<4x8x8xf32> to vector<4x8xf32>
    %42 = vector.shape_cast %41 : vector<4x8xf32> to vector<4x8x1xf32>
    %43 = tpu.reciprocal %42 : vector<4x8x1xf32> -> vector<4x8x1xf32>
    %44 = vector.broadcast %43 : vector<4x8x1xf32> to vector<4x8x8xf32>
    %45 = arith.mulf %40, %44 : vector<4x8x8xf32>
    %46 = arith.truncf %45 : vector<4x8x8xf32> to vector<4x8x8xbf16>
    "tpu.trace_start"() <{level = 10 : i32, message = "gqk,kgd->qgd"}> : () -> ()
    %cst_22 = arith.constant dense<0.000000e+00> : vector<4x8x8xf32>
    %47 = tpu.matmul %31, %46, %cst_22 {dimension_numbers = #tpu.dot_dimension_numbers<[0], [2], [2], [1], [0, 1, 0, 2, 1, 1], [1], [0]>} : vector<8x4x8xbf16>, vector<4x8x8xbf16>, vector<4x8x8xf32> -> vector<4x8x8xf32>
    %48 = tpu.transpose %47, [2, 0, 1] : vector<4x8x8xf32> -> vector<8x4x8xf32>
    "tpu.trace_stop"() : () -> ()
    %49 = vector.shape_cast %48 : vector<8x4x8xf32> to vector<8x32xf32>
    %c0_23 = arith.constant 0 : index
    %c0_24 = arith.constant 0 : index
    %50 = vector.load %arg16[%c0_23, %c0_24] : memref<8x32xf32, #tpu.memory_space<vmem>>, vector<8x32xf32>
    %51 = arith.truncf %49 : vector<8x32xf32> to vector<8x32xbf16>
    %c0_25 = arith.constant 0 : index
    %c0_26 = arith.constant 0 : index
    %c0_27 = arith.constant 0 : index
    %52 = vector.load %arg8[%c0_25, %c0_26, %c0_27] : memref<1x32x32xbf16, #tpu.memory_space<vmem>>, vector<1x32x32xbf16>
    %53 = vector.shape_cast %52 : vector<1x32x32xbf16> to vector<32x32xbf16>
    %cst_28 = arith.constant dense<0.000000e+00> : vector<8x32xf32>
    %54 = tpu.matmul %51, %53, %cst_28 {dimension_numbers = #tpu.dot_dimension_numbers<[1], [0], [0], [1], [0, 0, 1, 1], [], []>} : vector<8x32xbf16>, vector<32x32xbf16>, vector<8x32xf32> -> vector<8x32xf32>
    %55 = arith.addf %50, %54 : vector<8x32xf32>
    %c0_29 = arith.constant 0 : index
    %c0_30 = arith.constant 0 : index
    %56 = vector.load %arg16[%c0_29, %c0_30] : memref<8x32xf32, #tpu.memory_space<vmem>>, vector<8x32xf32>
    tpu.vector_store %arg16[%c0_29, %c0_30], %55 {strides = array<i32>} : memref<8x32xf32, #tpu.memory_space<vmem>>, vector<8x32xf32>,
    %c0_31 = arith.constant 0 : index
    %c0_32 = arith.constant 0 : index
    %57 = vector.load %arg17[%c0_31, %c0_32] : memref<8x128xf32, #tpu.memory_space<vmem>>, vector<8x8xf32>
    %cst_33 = arith.constant dense<0.000000e+00> : vector<8x8xf32>
    %58 = vector.multi_reduction <add>, %45, %cst_33 [0] : vector<4x8x8xf32> to vector<8x8xf32>
    %59 = arith.addf %57, %58 : vector<8x8xf32>
    %c0_34 = arith.constant 0 : index
    %c0_35 = arith.constant 0 : index
    %60 = vector.load %arg17[%c0_34, %c0_35] : memref<8x128xf32, #tpu.memory_space<vmem>>, vector<8x8xf32>
    tpu.vector_store %arg17[%c0_34, %c0_35], %59 {strides = array<i32>} : memref<8x128xf32, #tpu.memory_space<vmem>>, vector<8x8xf32>,
    %c0_i32_36 = arith.constant 0 : i32
    %61 = arith.cmpi eq, %arg1, %c0_i32_36 : i32
    %62 = arith.extui %61 : i1 to i32
    %c0_i32_37 = arith.constant 0 : i32
    %63 = arith.cmpi ne, %62, %c0_i32_37 : i32
    scf.if %63 {
      %c0_38 = arith.constant 0 : index
      %c0_39 = arith.constant 0 : index
      %64 = vector.load %arg12[%c0_38, %c0_39] : memref<6x32xf32, #tpu.memory_space<vmem>>, vector<6x32xf32>
      %c0_40 = arith.constant 0 : index
      %c0_41 = arith.constant 0 : index
      %c0_42 = arith.constant 0 : index
      %65 = vector.load %arg2[%c0_40, %c0_41, %c0_42] : memref<1x8x32xf32, #tpu.memory_space<vmem>>, vector<1x8x32xf32>
      %66 = vector.shape_cast %65 : vector<1x8x32xf32> to vector<8x32xf32>
      %c0_43 = arith.constant 0 : index
      %c0_44 = arith.constant 0 : index
      %67 = vector.load %arg16[%c0_43, %c0_44] : memref<8x32xf32, #tpu.memory_space<vmem>>, vector<8x32xf32>
      %68 = vector.extract_strided_slice %64 {offsets = [4, 0], sizes = [1, 32], strides = [1, 1]} : vector<6x32xf32> to vector<1x32xf32>
      %69 = vector.broadcast %68 : vector<1x32xf32> to vector<8x32xf32>
      %70 = arith.addf %67, %69 : vector<8x32xf32>
      %71 = arith.addf %66, %70 : vector<8x32xf32>
      %72 = vector.extract_strided_slice %64 {offsets = [0, 0], sizes = [1, 32], strides = [1, 1]} : vector<6x32xf32> to vector<1x32xf32>
      %73 = vector.extract_strided_slice %64 {offsets = [1, 0], sizes = [1, 32], strides = [1, 1]} : vector<6x32xf32> to vector<1x32xf32>
      %cst_45 = arith.constant dense<0.000000e+00> : vector<8xf32>
      %74 = vector.multi_reduction <add>, %71, %cst_45 [1] : vector<8x32xf32> to vector<8xf32>
      %75 = vector.shape_cast %74 : vector<8xf32> to vector<8x1xf32>
      %cst_46 = arith.constant 3.200000e+01 : f32
      %76 = vector.broadcast %cst_46 : f32 to vector<8x1xf32>
      %77 = arith.divf %75, %76 : vector<8x1xf32>
      %78 = vector.broadcast %77 : vector<8x1xf32> to vector<8x32xf32>
      %79 = arith.subf %71, %78 : vector<8x32xf32>
      %80 = arith.mulf %79, %79 : vector<8x32xf32>
      %cst_47 = arith.constant dense<0.000000e+00> : vector<8xf32>
      %81 = vector.multi_reduction <add>, %80, %cst_47 [1] : vector<8x32xf32> to vector<8xf32>
      %82 = vector.shape_cast %81 : vector<8xf32> to vector<8x1xf32>
      %cst_48 = arith.constant 3.200000e+01 : f32
      %83 = vector.broadcast %cst_48 : f32 to vector<8x1xf32>
      %84 = arith.divf %82, %83 : vector<8x1xf32>
      %cst_49 = arith.constant 9.99999974E-6 : f32
      %85 = vector.broadcast %cst_49 : f32 to vector<8x1xf32>
      %86 = arith.addf %84, %85 : vector<8x1xf32>
      %87 = math.rsqrt %86 : vector<8x1xf32>
      %88 = vector.broadcast %87 : vector<8x1xf32> to vector<8x32xf32>
      %89 = arith.mulf %79, %88 : vector<8x32xf32>
      %90 = vector.broadcast %72 : vector<1x32xf32> to vector<8x32xf32>
      %91 = arith.mulf %89, %90 : vector<8x32xf32>
      %92 = vector.broadcast %73 : vector<1x32xf32> to vector<8x32xf32>
      %93 = arith.addf %91, %92 : vector<8x32xf32>
      %94 = arith.truncf %93 : vector<8x32xf32> to vector<8x32xbf16>
      %c0_50 = arith.constant 0 : index
      %c0_51 = arith.constant 0 : index
      %95 = vector.load %arg9[%c0_50, %c0_51] : memref<32x64xbf16, #tpu.memory_space<vmem>>, vector<32x64xbf16>
      %cst_52 = arith.constant dense<0.000000e+00> : vector<8x64xf32>
      %96 = tpu.matmul %94, %95, %cst_52 {dimension_numbers = #tpu.dot_dimension_numbers<[1], [0], [0], [1], [0, 0, 1, 1], [], []>} : vector<8x32xbf16>, vector<32x64xbf16>, vector<8x64xf32> -> vector<8x64xf32>
      %c0_53 = arith.constant 0 : index
      %c0_54 = arith.constant 0 : index
      %97 = vector.load %arg10[%c0_53, %c0_54] : memref<1x64xf32, #tpu.memory_space<vmem>>, vector<1x64xf32>
      %98 = vector.broadcast %97 : vector<1x64xf32> to vector<8x64xf32>
      %99 = arith.addf %96, %98 : vector<8x64xf32>
      %cst_55 = arith.constant 0.000000e+00 : f32
      %100 = vector.broadcast %cst_55 : f32 to vector<8x64xf32>
      %101 = arith.maximumf %99, %100 : vector<8x64xf32>
      %102 = arith.truncf %101 : vector<8x64xf32> to vector<8x64xbf16>
      %c0_56 = arith.constant 0 : index
      %c0_57 = arith.constant 0 : index
      %103 = vector.load %arg11[%c0_56, %c0_57] : memref<64x32xbf16, #tpu.memory_space<vmem>>, vector<64x32xbf16>
      %cst_58 = arith.constant dense<0.000000e+00> : vector<8x32xf32>
      %104 = tpu.matmul %102, %103, %cst_58 {dimension_numbers = #tpu.dot_dimension_numbers<[1], [0], [0], [1], [0, 0, 1, 1], [], []>} : vector<8x64xbf16>, vector<64x32xbf16>, vector<8x32xf32> -> vector<8x32xf32>
      %105 = vector.extract_strided_slice %64 {offsets = [5, 0], sizes = [1, 32], strides = [1, 1]} : vector<6x32xf32> to vector<1x32xf32>
      %106 = vector.broadcast %105 : vector<1x32xf32> to vector<8x32xf32>
      %107 = arith.addf %104, %106 : vector<8x32xf32>
      %108 = arith.addf %93, %107 : vector<8x32xf32>
      %109 = vector.extract_strided_slice %64 {offsets = [2, 0], sizes = [1, 32], strides = [1, 1]} : vector<6x32xf32> to vector<1x32xf32>
      %110 = vector.extract_strided_slice %64 {offsets = [3, 0], sizes = [1, 32], strides = [1, 1]} : vector<6x32xf32> to vector<1x32xf32>
      %cst_59 = arith.constant dense<0.000000e+00> : vector<8xf32>
      %111 = vector.multi_reduction <add>, %108, %cst_59 [1] : vector<8x32xf32> to vector<8xf32>
      %112 = vector.shape_cast %111 : vector<8xf32> to vector<8x1xf32>
      %cst_60 = arith.constant 3.200000e+01 : f32
      %113 = vector.broadcast %cst_60 : f32 to vector<8x1xf32>
      %114 = arith.divf %112, %113 : vector<8x1xf32>
      %115 = vector.broadcast %114 : vector<8x1xf32> to vector<8x32xf32>
      %116 = arith.subf %108, %115 : vector<8x32xf32>
      %117 = arith.mulf %116, %116 : vector<8x32xf32>
      %cst_61 = arith.constant dense<0.000000e+00> : vector<8xf32>
      %118 = vector.multi_reduction <add>, %117, %cst_61 [1] : vector<8x32xf32> to vector<8xf32>
      %119 = vector.shape_cast %118 : vector<8xf32> to vector<8x1xf32>
      %cst_62 = arith.constant 3.200000e+01 : f32
      %120 = vector.broadcast %cst_62 : f32 to vector<8x1xf32>
      %121 = arith.divf %119, %120 : vector<8x1xf32>
      %cst_63 = arith.constant 9.99999974E-6 : f32
      %122 = vector.broadcast %cst_63 : f32 to vector<8x1xf32>
      %123 = arith.addf %121, %122 : vector<8x1xf32>
      %124 = math.rsqrt %123 : vector<8x1xf32>
      %125 = vector.broadcast %124 : vector<8x1xf32> to vector<8x32xf32>
      %126 = arith.mulf %116, %125 : vector<8x32xf32>
      %127 = vector.broadcast %109 : vector<1x32xf32> to vector<8x32xf32>
      %128 = arith.mulf %126, %127 : vector<8x32xf32>
      %129 = vector.broadcast %110 : vector<1x32xf32> to vector<8x32xf32>
      %130 = arith.addf %128, %129 : vector<8x32xf32>
      %c0_64 = arith.constant 0 : index
      %c0_65 = arith.constant 0 : index
      %c0_66 = arith.constant 0 : index
      %131 = vector.load %arg13[%c0_64, %c0_65, %c0_66] : memref<1x8x32xf32, #tpu.memory_space<vmem>>, vector<1x8x32xf32>
      %132 = vector.shape_cast %131 : vector<1x8x32xf32> to vector<8x32xf32>
      %133 = vector.shape_cast %130 : vector<8x32xf32> to vector<1x8x32xf32>
      tpu.vector_store %arg13[%c0_64, %c0_65, %c0_66], %133 {strides = array<i32>} : memref<1x8x32xf32, #tpu.memory_space<vmem>>, vector<1x8x32xf32>,
      %c0_67 = arith.constant 0 : index
      %c0_68 = arith.constant 0 : index
      %134 = vector.load %arg17[%c0_67, %c0_68] : memref<8x128xf32, #tpu.memory_space<vmem>>, vector<8x128xf32>
      %cst_69 = arith.constant 2.500000e-01 : f32
      %135 = vector.broadcast %cst_69 : f32 to vector<8x128xf32>
      %136 = arith.mulf %134, %135 : vector<8x128xf32>
      %c0_70 = arith.constant 0 : index
      %c0_71 = arith.constant 0 : index
      %c0_72 = arith.constant 0 : index
      %137 = vector.load %arg14[%c0_70, %c0_71, %c0_72] : memref<1x8x128xf32, #tpu.memory_space<vmem>>, vector<1x8x128xf32>
      %138 = vector.shape_cast %137 : vector<1x8x128xf32> to vector<8x128xf32>
      %139 = vector.shape_cast %136 : vector<8x128xf32> to vector<1x8x128xf32>
      tpu.vector_store %arg14[%c0_70, %c0_71, %c0_72], %139 {strides = array<i32>} : memref<1x8x128xf32, #tpu.memory_space<vmem>>, vector<1x8x128xf32>,
    } else {
    }
    return
  }
  func.func @transform_0(%arg0: i32, %arg1: i32) -> (i32, i32, i32) {
    %c0_i32 = arith.constant 0 : i32
    %c0_i32_0 = arith.constant 0 : i32
    %c0_i32_1 = arith.constant 0 : i32
    return %arg0, %c0_i32, %c0_i32_0 : i32, i32, i32
  }
  func.func @transform_1(%arg0: i32, %arg1: i32) -> (i32, i32, i32) {
    %c0_i32 = arith.constant 0 : i32
    %c0_i32_0 = arith.constant 0 : i32
    %c0_i32_1 = arith.constant 0 : i32
    return %arg0, %c0_i32, %c0_i32_0 : i32, i32, i32
  }
  func.func @transform_2(%arg0: i32, %arg1: i32) -> (i32, i32, i32) {
    %c0_i32 = arith.constant 0 : i32
    %c0_i32_0 = arith.constant 0 : i32
    %c0_i32_1 = arith.constant 0 : i32
    return %arg1, %c0_i32, %c0_i32_0 : i32, i32, i32
  }
  func.func @transform_3(%arg0: i32, %arg1: i32) -> (i32, i32, i32) {
    %c0_i32 = arith.constant 0 : i32
    %c0_i32_0 = arith.constant 0 : i32
    %c0_i32_1 = arith.constant 0 : i32
    return %arg1, %c0_i32, %c0_i32_0 : i32, i32, i32
  }
  func.func @transform_4(%arg0: i32, %arg1: i32) -> (i32, i32, i32) {
    %c0_i32 = arith.constant 0 : i32
    %c0_i32_0 = arith.constant 0 : i32
    %c0_i32_1 = arith.constant 0 : i32
    return %arg1, %c0_i32, %c0_i32_0 : i32, i32, i32
  }
  func.func @transform_5(%arg0: i32, %arg1: i32) -> (i32, i32, i32) {
    %c0_i32 = arith.constant 0 : i32
    %c0_i32_0 = arith.constant 0 : i32
    %c0_i32_1 = arith.constant 0 : i32
    return %arg1, %c0_i32, %c0_i32_0 : i32, i32, i32
  }
  func.func @transform_6(%arg0: i32, %arg1: i32) -> (i32, i32, i32) {
    %c0_i32 = arith.constant 0 : i32
    %c0_i32_0 = arith.constant 0 : i32
    %c0_i32_1 = arith.constant 0 : i32
    return %arg1, %c0_i32, %c0_i32_0 : i32, i32, i32
  }
  func.func @transform_7(%arg0: i32, %arg1: i32) -> (i32, i32) {
    %c0_i32 = arith.constant 0 : i32
    %c0_i32_0 = arith.constant 0 : i32
    %c0_i32_1 = arith.constant 0 : i32
    return %c0_i32, %c0_i32_0 : i32, i32
  }
  func.func @transform_8(%arg0: i32, %arg1: i32) -> (i32, i32) {
    %c0_i32 = arith.constant 0 : i32
    %c0_i32_0 = arith.constant 0 : i32
    %c0_i32_1 = arith.constant 0 : i32
    return %c0_i32, %c0_i32_0 : i32, i32
  }
  func.func @transform_9(%arg0: i32, %arg1: i32) -> (i32, i32) {
    %c0_i32 = arith.constant 0 : i32
    %c0_i32_0 = arith.constant 0 : i32
    %c0_i32_1 = arith.constant 0 : i32
    return %c0_i32, %c0_i32_0 : i32, i32
  }
  func.func @transform_10(%arg0: i32, %arg1: i32) -> (i32, i32) {
    %c0_i32 = arith.constant 0 : i32
    %c0_i32_0 = arith.constant 0 : i32
    %c0_i32_1 = arith.constant 0 : i32
    return %c0_i32, %c0_i32_0 : i32, i32
  }
  func.func @transform_11(%arg0: i32, %arg1: i32) -> (i32, i32, i32) {
    %c0_i32 = arith.constant 0 : i32
    %c0_i32_0 = arith.constant 0 : i32
    %c0_i32_1 = arith.constant 0 : i32
    return %arg0, %c0_i32, %c0_i32_0 : i32, i32, i32
  }
  func.func @transform_12(%arg0: i32, %arg1: i32) -> (i32, i32, i32) {
    %c0_i32 = arith.constant 0 : i32
    %c0_i32_0 = arith.constant 0 : i32
    %c0_i32_1 = arith.constant 0 : i32
    return %arg0, %c0_i32, %c0_i32_0 : i32, i32, i32
  }
}

</mosaic_0001>

<llo_original>
// kernel: tpu_custom_call.1
$region0: #{tpu_custom_call.1}
  #allocation0 [shape = 'u32[]', space=smem, size = 0x4, offset = 0x4, fixed_abs, tag = 'smem constant byte address 0x4 - core index']
  #allocation1 [shape = 'u32[72,128]{1,0:T(1,128)}', space=vmem, size = 0x9000, scoped, tag = 'internal scratch']
  #allocation2 [shape = 'bf16[8,32]{1,0:T(8,128)(2,1)}', space=vmem, size = 0x800, scoped, tag = 'scratch operand']
  #allocation3 [shape = 'f32[8,32]{1,0:T(8,128)}', space=vmem, size = 0x1000, scoped, tag = 'scratch operand']
  #allocation4 [shape = 'f32[8,128]{1,0:T(8,128)}', space=vmem, size = 0x1000, scoped, tag = 'scratch operand']
  %s0 = inlined_call_operand.vmem [shape: f32[2,8,32], index: 0, kind: input, shape index: {}]
  %s1 = inlined_call_operand.hbm [shape: f32[2,1,8], index: 1, kind: input, shape index: {}]
  %s2 = inlined_call_operand.vmem [shape: bf16[1,32,32], index: 2, kind: input, shape index: {}]
  %s3 = inlined_call_operand.vmem [shape: bf16[1,32,32], index: 3, kind: input, shape index: {}]
  %s4 = inlined_call_operand.hbm [shape: bf16[1,32,32], index: 4, kind: input, shape index: {}]
  %s5 = inlined_call_operand.vmem [shape: f32[1,3,32], index: 5, kind: input, shape index: {}]
  %s6 = inlined_call_operand.hbm [shape: bf16[1,32,32], index: 6, kind: input, shape index: {}]
  %s7 = inlined_call_operand.hbm [shape: bf16[32,64], index: 7, kind: input, shape index: {}]
  %s8 = inlined_call_operand.vmem [shape: f32[1,64], index: 8, kind: input, shape index: {}]
  %s9 = inlined_call_operand.vmem [shape: bf16[64,32], index: 9, kind: input, shape index: {}]
  %s10 = inlined_call_operand.vmem [shape: f32[6,32], index: 10, kind: input, shape index: {}]
  %s11 = inlined_call_operand.hbm [shape: f32[2,8,32], index: 11, kind: output, shape index: {0}]
  %s12 = inlined_call_operand.hbm [shape: f32[2,8,128], index: 12, kind: output, shape index: {1}]
  %13 = xla_tuple %s11, %s12
  %s14 = sld [smem:[#allocation0]]
  $region109: #{tpu_custom_call.1} parent=0
    _
  %s16 = ssub.s32 1, %s14
  %s17 = scalar_select 0, %s16, %s14
  $region1: #{tpu_custom_call.1} parent=0
    #allocation5 [shape = 'u8[1024]{0}', space=vmem, size = 0x400, scoped, tag = 'input window, operand 1']
    #allocation6 [shape = 's32[2]{0}', space=sflag, size = 0x8, scoped, tag = 'scoped memory for tpu_custom_call.1']
    #allocation7 [shape = 's32[2]{0}', space=sflag, size = 0x8, scoped, tag = 'scoped memory for tpu_custom_call.1']
    #allocation8 [shape = 'u8[8192]{0}', space=vmem, size = 0x2000, scoped, tag = 'input window, operand 4, single buffered']
    #allocation9 [shape = 's32[1]{0}', space=sflag, size = 0x4, scoped, tag = 'scoped memory for tpu_custom_call.1']
    #allocation10 [shape = 'u8[8192]{0}', space=vmem, size = 0x2000, scoped, tag = 'input window, operand 6, single buffered']
    #allocation11 [shape = 'u8[8192]{0}', space=vmem, size = 0x2000, scoped, tag = 'input window, operand 7, single buffered']
    #allocation12 [shape = 's32[1]{0}', space=sflag, size = 0x4, scoped, tag = 'scoped memory for tpu_custom_call.1']
    #allocation13 [shape = 'u8[8192]{0}', space=vmem, size = 0x2000, scoped, tag = 'output window, operand 0']
    #allocation14 [shape = 'u8[8192]{0}', space=vmem, size = 0x2000, scoped, tag = 'output window, operand 1']
    #allocation15 [shape = 's32[2]{0}', space=sflag, size = 0x8, scoped, tag = 'scoped memory for tpu_custom_call.1']
    %18 = vsyncpa [#allocation6], 0
    %s19 = scalar_lea.sflag [#allocation6], 1
    %20 = vsyncpa %s19, 0
    %21 = vsyncpa [#allocation9], 0
    %22 = vsyncpa [#allocation12], 0
    %23 = vsyncpa [#allocation7], 0
    %s24 = scalar_lea.sflag [#allocation7], 1
    %25 = vsyncpa %s24, 0
    %26 = vsyncpa [#allocation15], 0
    %s27 = scalar_lea.sflag [#allocation15], 1
    %28 = vsyncpa %s27, 0
    loop: start=0, step=1, limit=4
    $region2: #{tpu_custom_call.1} parent=1 // loop_pre_header
      _
    $region3: #{tpu_custom_call.1} parent=1 // loop_header
      %s30 = sphi 0, %s34
      %p31 = scmp.ge.s32.totalorder %s30, 4
      %s37 = sphi 0, %s49
      %s38 = sphi 0, %s45
      %s39 = sphi 0, %s37
      %s40 = sphi 0, %s38
      %s41 = sphi 0, %s39
      %s42 = sphi 0, %s40
      %s52 = sphi 0, %s54
      %s55 = sphi 0, %s52
      %s56 = sphi 0, %s55
      %s72 = sphi 0, %s56
      %s78 = sphi 0, %s80
      %s81 = sphi 0, %s78
      %s82 = sphi 0, %s81
      %s98 = sphi 0, %s82
      %s104 = sphi 0, %s106
      %s107 = sphi 0, %s104
      %s108 = sphi 0, %s107
      %s124 = sphi 0, %s108
      %s130 = sphi 0, %s132
      %s133 = sphi 0, %s130
      %s134 = sphi 0, %s133
      %s150 = sphi 0, %s134
      %s156 = sphi 0, %s158
      %s159 = sphi 0, %s156
      %s160 = sphi 0, %s159
      %s176 = sphi 0, %s160
      %s182 = sphi 0, %s184
      %s185 = sphi 0, %s182
      %s186 = sphi 0, %s185
      %s202 = sphi 0, %s186
      %s208 = sphi 0, %s210
      %s211 = sphi 0, %s208
      %s212 = sphi 0, %s211
      %s228 = sphi 0, %s212
      %s232 = sphi 0, %s232
      %s234 = sphi 0, %s232
      %s235 = sphi 0, %s234
      %s249 = sphi 0, %s235
      %s253 = sphi 0, %s253
      %s255 = sphi 0, %s253
      %s256 = sphi 0, %s255
      %s270 = sphi 0, %s256
      %s274 = sphi 0, %s274
      %s276 = sphi 0, %s274
      %s277 = sphi 0, %s276
      %s291 = sphi 0, %s277
      %s295 = sphi 0, %s295
      %s297 = sphi 0, %s295
      %s298 = sphi 0, %s297
      %s312 = sphi 0, %s298
      %s318 = sphi 0, %s320
      %s321 = sphi 0, %s318
      %s322 = sphi 0, %s321
      %s338 = sphi 0, %s322
      %s344 = sphi 0, %s346
      %s347 = sphi 0, %s344
      %s348 = sphi 0, %s347
      %s364 = sphi 0, %s348
    $region4: #{tpu_custom_call.1} parent=1 // loop_header_branch
      %33 = sbr.rel (%p31) target = $region8
    $region5: #{tpu_custom_call.1} parent=1 // loop_body
      %s35 = ssub.s32 %s30, 1
      %s36 = ssub.s32 %s30, 2
      %s43 = sadd.s32 1, %s38
      %p44 = scmp.ge.s32.totalorder %s43, 1
      %s45 = scalar_select %p44, 0, %s43
      %s46 = sadd.s32 1, %s37
      %s47 = scalar_select %p44, %s46, %s37
      %p48 = scmp.ge.s32.totalorder %s47, 2
      %s49 = scalar_select %p48, 0, %s47
      %s50 = ssub.s32 %s37, %s49
      %p51 = scmp.eq.s32.totalorder %s50, 0
      %s53 = sadd.s32 %s52, 1
      %s54 = scalar_select %p51, %s52, %s53
      %p57 = pneg %p51
      %p58 = scmp.eq.s32.totalorder %s30, 1
      %p59 = por %p57, %p58
      %p60 = scmp.ne.s32.totalorder %s52, %s55
      %p61 = scmp.eq.s32.totalorder %s30, 0
      %p62 = por %p60, %p61
      %p63 = scmp.ne.s32.totalorder %s52, %s55
      %p64 = scmp.eq.s32.totalorder %s35, 1
      %p65 = por %p63, %p64
      %p66 = scmp.ne.s32.totalorder %s55, %s56
      %p67 = scmp.eq.s32.totalorder %s35, 0
      %p68 = por %p66, %p67
      %p69 = scmp.ne.s32.totalorder %s55, %s56
      %p70 = scmp.eq.s32.totalorder %s36, 1
      %p71 = por %p69, %p70
      %p73 = scmp.ne.s32.totalorder %s56, %s72
      %p74 = scmp.eq.s32.totalorder %s36, 0
      %p75 = por %p73, %p74
      %s76 = ssub.s32 %s37, %s49
      %p77 = scmp.eq.s32.totalorder %s76, 0
      %s79 = sadd.s32 %s78, 1
      %s80 = scalar_select %p77, %s78, %s79
      %p83 = pneg %p77
      %p84 = scmp.eq.s32.totalorder %s30, 1
      %p85 = por %p83, %p84
      %p86 = scmp.ne.s32.totalorder %s78, %s81
      %p87 = scmp.eq.s32.totalorder %s30, 0
      %p88 = por %p86, %p87
      %p89 = scmp.ne.s32.totalorder %s78, %s81
      %p90 = scmp.eq.s32.totalorder %s35, 1
      %p91 = por %p89, %p90
      %p92 = scmp.ne.s32.totalorder %s81, %s82
      %p93 = scmp.eq.s32.totalorder %s35, 0
      %p94 = por %p92, %p93
      %p95 = scmp.ne.s32.totalorder %s81, %s82
      %p96 = scmp.eq.s32.totalorder %s36, 1
      %p97 = por %p95, %p96
      %p99 = scmp.ne.s32.totalorder %s82, %s98
      %p100 = scmp.eq.s32.totalorder %s36, 0
      %p101 = por %p99, %p100
      %s102 = ssub.s32 %s38, %s45
      %p103 = scmp.eq.s32.totalorder %s102, 0
      %s105 = sadd.s32 %s104, 1
      %s106 = scalar_select %p103, %s104, %s105
      %p109 = pneg %p103
      %p110 = scmp.eq.s32.totalorder %s30, 1
      %p111 = por %p109, %p110
      %p112 = scmp.ne.s32.totalorder %s104, %s107
      %p113 = scmp.eq.s32.totalorder %s30, 0
      %p114 = por %p112, %p113
      %p115 = scmp.ne.s32.totalorder %s104, %s107
      %p116 = scmp.eq.s32.totalorder %s35, 1
      %p117 = por %p115, %p116
      %p118 = scmp.ne.s32.totalorder %s107, %s108
      %p119 = scmp.eq.s32.totalorder %s35, 0
      %p120 = por %p118, %p119
      %p121 = scmp.ne.s32.totalorder %s107, %s108
      %p122 = scmp.eq.s32.totalorder %s36, 1
      %p123 = por %p121, %p122
      %p125 = scmp.ne.s32.totalorder %s108, %s124
      %p126 = scmp.eq.s32.totalorder %s36, 0
      %p127 = por %p125, %p126
      %s128 = ssub.s32 %s38, %s45
      %p129 = scmp.eq.s32.totalorder %s128, 0
      %s131 = sadd.s32 %s130, 1
      %s132 = scalar_select %p129, %s130, %s131
      %p135 = pneg %p129
      %p136 = scmp.eq.s32.totalorder %s30, 1
      %p137 = por %p135, %p136
      %p138 = scmp.ne.s32.totalorder %s130, %s133
      %p139 = scmp.eq.s32.totalorder %s30, 0
      %p140 = por %p138, %p139
      %p141 = scmp.ne.s32.totalorder %s130, %s133
      %p142 = scmp.eq.s32.totalorder %s35, 1
      %p143 = por %p141, %p142
      %p144 = scmp.ne.s32.totalorder %s133, %s134
      %p145 = scmp.eq.s32.totalorder %s35, 0
      %p146 = por %p144, %p145
      %p147 = scmp.ne.s32.totalorder %s133, %s134
      %p148 = scmp.eq.s32.totalorder %s36, 1
      %p149 = por %p147, %p148
      %p151 = scmp.ne.s32.totalorder %s134, %s150
      %p152 = scmp.eq.s32.totalorder %s36, 0
      %p153 = por %p151, %p152
      %s154 = ssub.s32 %s38, %s45
      %p155 = scmp.eq.s32.totalorder %s154, 0
      %s157 = sadd.s32 %s156, 1
      %s158 = scalar_select %p155, %s156, %s157
      %p161 = pneg %p155
      %p162 = scmp.eq.s32.totalorder %s30, 1
      %p163 = por %p161, %p162
      %p164 = scmp.ne.s32.totalorder %s156, %s159
      %p165 = scmp.eq.s32.totalorder %s30, 0
      %p166 = por %p164, %p165
      %p167 = scmp.ne.s32.totalorder %s156, %s159
      %p168 = scmp.eq.s32.totalorder %s35, 1
      %p169 = por %p167, %p168
      %p170 = scmp.ne.s32.totalorder %s159, %s160
      %p171 = scmp.eq.s32.totalorder %s35, 0
      %p172 = por %p170, %p171
      %p173 = scmp.ne.s32.totalorder %s159, %s160
      %p174 = scmp.eq.s32.totalorder %s36, 1
      %p175 = por %p173, %p174
      %p177 = scmp.ne.s32.totalorder %s160, %s176
      %p178 = scmp.eq.s32.totalorder %s36, 0
      %p179 = por %p177, %p178
      %s180 = ssub.s32 %s38, %s45
      %p181 = scmp.eq.s32.totalorder %s180, 0
      %s183 = sadd.s32 %s182, 1
      %s184 = scalar_select %p181, %s182, %s183
      %p187 = pneg %p181
      %p188 = scmp.eq.s32.totalorder %s30, 1
      %p189 = por %p187, %p188
      %p190 = scmp.ne.s32.totalorder %s182, %s185
      %p191 = scmp.eq.s32.totalorder %s30, 0
      %p192 = por %p190, %p191
      %p193 = scmp.ne.s32.totalorder %s182, %s185
      %p194 = scmp.eq.s32.totalorder %s35, 1
      %p195 = por %p193, %p194
      %p196 = scmp.ne.s32.totalorder %s185, %s186
      %p197 = scmp.eq.s32.totalorder %s35, 0
      %p198 = por %p196, %p197
      %p199 = scmp.ne.s32.totalorder %s185, %s186
      %p200 = scmp.eq.s32.totalorder %s36, 1
      %p201 = por %p199, %p200
      %p203 = scmp.ne.s32.totalorder %s186, %s202
      %p204 = scmp.eq.s32.totalorder %s36, 0
      %p205 = por %p203, %p204
      %s206 = ssub.s32 %s38, %s45
      %p207 = scmp.eq.s32.totalorder %s206, 0
      %s209 = sadd.s32 %s208, 1
      %s210 = scalar_select %p207, %s208, %s209
      %p213 = pneg %p207
      %p214 = scmp.eq.s32.totalorder %s30, 1
      %p215 = por %p213, %p214
      %p216 = scmp.ne.s32.totalorder %s208, %s211
      %p217 = scmp.eq.s32.totalorder %s30, 0
      %p218 = por %p216, %p217
      %p219 = scmp.ne.s32.totalorder %s208, %s211
      %p220 = scmp.eq.s32.totalorder %s35, 1
      %p221 = por %p219, %p220
      %p222 = scmp.ne.s32.totalorder %s211, %s212
      %p223 = scmp.eq.s32.totalorder %s35, 0
      %p224 = por %p222, %p223
      %p225 = scmp.ne.s32.totalorder %s211, %s212
      %p226 = scmp.eq.s32.totalorder %s36, 1
      %p227 = por %p225, %p226
      %p229 = scmp.ne.s32.totalorder %s212, %s228
      %p230 = scmp.eq.s32.totalorder %s36, 0
      %p231 = por %p229, %p230
      %s233 = sadd.s32 %s232, 1
      %p236 = scmp.eq.s32.totalorder %s30, 1
      %p237 = scmp.ne.s32.totalorder %s232, %s234
      %p238 = scmp.eq.s32.totalorder %s30, 0
      %p239 = por %p237, %p238
      %p240 = scmp.ne.s32.totalorder %s232, %s234
      %p241 = scmp.eq.s32.totalorder %s35, 1
      %p242 = por %p240, %p241
      %p243 = scmp.ne.s32.totalorder %s234, %s235
      %p244 = scmp.eq.s32.totalorder %s35, 0
      %p245 = por %p243, %p244
      %p246 = scmp.ne.s32.totalorder %s234, %s235
      %p247 = scmp.eq.s32.totalorder %s36, 1
      %p248 = por %p246, %p247
      %p250 = scmp.ne.s32.totalorder %s235, %s249
      %p251 = scmp.eq.s32.totalorder %s36, 0
      %p252 = por %p250, %p251
      %s254 = sadd.s32 %s253, 1
      %p257 = scmp.eq.s32.totalorder %s30, 1
      %p258 = scmp.ne.s32.totalorder %s253, %s255
      %p259 = scmp.eq.s32.totalorder %s30, 0
      %p260 = por %p258, %p259
      %p261 = scmp.ne.s32.totalorder %s253, %s255
      %p262 = scmp.eq.s32.totalorder %s35, 1
      %p263 = por %p261, %p262
      %p264 = scmp.ne.s32.totalorder %s255, %s256
      %p265 = scmp.eq.s32.totalorder %s35, 0
      %p266 = por %p264, %p265
      %p267 = scmp.ne.s32.totalorder %s255, %s256
      %p268 = scmp.eq.s32.totalorder %s36, 1
      %p269 = por %p267, %p268
      %p271 = scmp.ne.s32.totalorder %s256, %s270
      %p272 = scmp.eq.s32.totalorder %s36, 0
      %p273 = por %p271, %p272
      %s275 = sadd.s32 %s274, 1
      %p278 = scmp.eq.s32.totalorder %s30, 1
      %p279 = scmp.ne.s32.totalorder %s274, %s276
      %p280 = scmp.eq.s32.totalorder %s30, 0
      %p281 = por %p279, %p280
      %p282 = scmp.ne.s32.totalorder %s274, %s276
      %p283 = scmp.eq.s32.totalorder %s35, 1
      %p284 = por %p282, %p283
      %p285 = scmp.ne.s32.totalorder %s276, %s277
      %p286 = scmp.eq.s32.totalorder %s35, 0
      %p287 = por %p285, %p286
      %p288 = scmp.ne.s32.totalorder %s276, %s277
      %p289 = scmp.eq.s32.totalorder %s36, 1
      %p290 = por %p288, %p289
      %p292 = scmp.ne.s32.totalorder %s277, %s291
      %p293 = scmp.eq.s32.totalorder %s36, 0
      %p294 = por %p292, %p293
      %s296 = sadd.s32 %s295, 1
      %p299 = scmp.eq.s32.totalorder %s30, 1
      %p300 = scmp.ne.s32.totalorder %s295, %s297
      %p301 = scmp.eq.s32.totalorder %s30, 0
      %p302 = por %p300, %p301
      %p303 = scmp.ne.s32.totalorder %s295, %s297
      %p304 = scmp.eq.s32.totalorder %s35, 1
      %p305 = por %p303, %p304
      %p306 = scmp.ne.s32.totalorder %s297, %s298
      %p307 = scmp.eq.s32.totalorder %s35, 0
      %p308 = por %p306, %p307
      %p309 = scmp.ne.s32.totalorder %s297, %s298
      %p310 = scmp.eq.s32.totalorder %s36, 1
      %p311 = por %p309, %p310
      %p313 = scmp.ne.s32.totalorder %s298, %s312
      %p314 = scmp.eq.s32.totalorder %s36, 0
      %p315 = por %p313, %p314
      %s316 = ssub.s32 %s37, %s49
      %p317 = scmp.eq.s32.totalorder %s316, 0
      %s319 = sadd.s32 %s318, 1
      %s320 = scalar_select %p317, %s318, %s319
      %p323 = pneg %p317
      %p324 = scmp.eq.s32.totalorder %s30, 1
      %p325 = por %p323, %p324
      %p326 = scmp.ne.s32.totalorder %s318, %s321
      %p327 = scmp.eq.s32.totalorder %s30, 0
      %p328 = por %p326, %p327
      %p329 = scmp.ne.s32.totalorder %s318, %s321
      %p330 = scmp.eq.s32.totalorder %s35, 1
      %p331 = por %p329, %p330
      %p332 = scmp.ne.s32.totalorder %s321, %s322
      %p333 = scmp.eq.s32.totalorder %s35, 0
      %p334 = por %p332, %p333
      %p335 = scmp.ne.s32.totalorder %s321, %s322
      %p336 = scmp.eq.s32.totalorder %s36, 1
      %p337 = por %p335, %p336
      %p339 = scmp.ne.s32.totalorder %s322, %s338
      %p340 = scmp.eq.s32.totalorder %s36, 0
      %p341 = por %p339, %p340
      %s342 = ssub.s32 %s37, %s49
      %p343 = scmp.eq.s32.totalorder %s342, 0
      %s345 = sadd.s32 %s344, 1
      %s346 = scalar_select %p343, %s344, %s345
      %p349 = pneg %p343
      %p350 = scmp.eq.s32.totalorder %s30, 1
      %p351 = por %p349, %p350
      %p352 = scmp.ne.s32.totalorder %s344, %s347
      %p353 = scmp.eq.s32.totalorder %s30, 0
      %p354 = por %p352, %p353
      %p355 = scmp.ne.s32.totalorder %s344, %s347
      %p356 = scmp.eq.s32.totalorder %s35, 1
      %p357 = por %p355, %p356
      %p358 = scmp.ne.s32.totalorder %s347, %s348
      %p359 = scmp.eq.s32.totalorder %s35, 0
      %p360 = por %p358, %p359
      %p361 = scmp.ne.s32.totalorder %s347, %s348
      %p362 = scmp.eq.s32.totalorder %s36, 1
      %p363 = por %p361, %p362
      %p365 = scmp.ne.s32.totalorder %s348, %s364
      %p366 = scmp.eq.s32.totalorder %s36, 0
      %p367 = por %p365, %p366
      %p368 = scmp.le.s32.totalorder 1, %s30
      %p369 = scmp.lt.s32.totalorder %s30, 3
      %p370 = pnand %p368, %p369
      %p371 = pneg %p370
      // Predicated region
      $region9: #{tpu_custom_call.1} parent=5 // pred_check
        _
      $region10: #{tpu_custom_call.1} parent=5 // pred_check_branch
        %373 = sbr.rel (%p370) target = $region12
      $region11: #{tpu_custom_call.1} parent=5 // pred_region
        %s374 = ssub.s32 %s30, 1
        // Predicated region
        $region13: #{tpu_custom_call.1} parent=11 // pred_check
          %p375 = pneg %p120
        $region14: #{tpu_custom_call.1} parent=11 // pred_check_branch
          %377 = sbr.rel (%p375) target = $region16
        $region15: #{tpu_custom_call.1} parent=11 // pred_region
          %p378 = scmp.lt.s32.totalorder %s40, 0
          %s379 = scalar_select %p378, %s40, 0
          %s380 = smul.addr %s379, 4
          %s381 = smul.addr %s380, 4
          %s382 = scalar_lea.vmem %s2, %s381
        $region16: #{tpu_custom_call.1} parent=11 // pred_fallthru
          _
        // Predicated region
        $region17: #{tpu_custom_call.1} parent=11 // pred_check
          %p383 = pneg %p146
        $region18: #{tpu_custom_call.1} parent=11 // pred_check_branch
          %385 = sbr.rel (%p383) target = $region20
        $region19: #{tpu_custom_call.1} parent=11 // pred_region
          %p386 = scmp.lt.s32.totalorder %s40, 0
          %s387 = scalar_select %p386, %s40, 0
          %s388 = smul.addr %s387, 4
          %s389 = smul.addr %s388, 4
          %s390 = scalar_lea.vmem %s3, %s389
        $region20: #{tpu_custom_call.1} parent=11 // pred_fallthru
          _
        // Predicated region
        $region21: #{tpu_custom_call.1} parent=11 // pred_check
          %p391 = pneg %p172
        $region22: #{tpu_custom_call.1} parent=11 // pred_check_branch
          %393 = sbr.rel (%p391) target = $region24
        $region23: #{tpu_custom_call.1} parent=11 // pred_region
          %395 = vsyncadd [#allocation9], 0
          %s396 = smul.addr %s40, 4
          %s397 = smul.addr %s396, 4
          %s398 = scalar_lea.hbm %s4, %s397
          %s399 = sshll.u32 %s398, 4
          %s400 = int_to_ptr.hbm [resolvable:$true] %s399
          %s401 = sshll.u32 [#allocation8], 4
          %s402 = int_to_ptr.vmem [resolvable:$true] %s401
          %407 = dma.hbm_to_vmem [thread:$0]  %s400, 256, %s402, [#allocation9], 64, 64, 4
        $region24: #{tpu_custom_call.1} parent=11 // pred_fallthru
          _
        // Predicated region
        $region25: #{tpu_custom_call.1} parent=11 // pred_check
          %p408 = pneg %p198
        $region26: #{tpu_custom_call.1} parent=11 // pred_check_branch
          %410 = sbr.rel (%p408) target = $region28
        $region27: #{tpu_custom_call.1} parent=11 // pred_region
          %p411 = scmp.lt.s32.totalorder %s40, 0
          %s412 = scalar_select %p411, %s40, 0
          %s413 = smul.addr %s412, 4
          %s414 = scalar_lea.vmem %s5, %s413
        $region28: #{tpu_custom_call.1} parent=11 // pred_fallthru
          _
        // Predicated region
        $region29: #{tpu_custom_call.1} parent=11 // pred_check
          %p415 = pneg %p224
        $region30: #{tpu_custom_call.1} parent=11 // pred_check_branch
          %417 = sbr.rel (%p415) target = $region32
        $region31: #{tpu_custom_call.1} parent=11 // pred_region
          %419 = vsyncadd [#allocation9], 0
          %s420 = smul.addr %s40, 4
          %s421 = smul.addr %s420, 4
          %s422 = scalar_lea.hbm %s6, %s421
          %s423 = sshll.u32 %s422, 4
          %s424 = int_to_ptr.hbm [resolvable:$true] %s423
          %s425 = sshll.u32 [#allocation10], 4
          %s426 = int_to_ptr.vmem [resolvable:$true] %s425
          %431 = dma.hbm_to_vmem [thread:$0]  %s424, 256, %s426, [#allocation9], 64, 64, 4
        $region32: #{tpu_custom_call.1} parent=11 // pred_fallthru
          _
        // Predicated region
        $region33: #{tpu_custom_call.1} parent=11 // pred_check
          %p432 = pneg %p245
        $region34: #{tpu_custom_call.1} parent=11 // pred_check_branch
          %434 = sbr.rel (%p432) target = $region36
        $region35: #{tpu_custom_call.1} parent=11 // pred_region
          %436 = vsyncadd [#allocation12], 0
          %s437 = sshll.u32 %s7, 4
          %s438 = int_to_ptr.hbm [resolvable:$true] %s437
          %s439 = sshll.u32 [#allocation11], 4
          %s440 = int_to_ptr.vmem [resolvable:$true] %s439
          %445 = dma.hbm_to_vmem [thread:$0]  %s438, 256, %s440, [#allocation12], 64, 64, 4
        $region36: #{tpu_custom_call.1} parent=11 // pred_fallthru
          _
        // Predicated region
        $region37: #{tpu_custom_call.1} parent=11 // pred_check
          %p446 = pneg %p266
        $region38: #{tpu_custom_call.1} parent=11 // pred_check_branch
          %448 = sbr.rel (%p446) target = $region40
        $region39: #{tpu_custom_call.1} parent=11 // pred_region
          _
        $region40: #{tpu_custom_call.1} parent=11 // pred_fallthru
          _
        // Predicated region
        $region41: #{tpu_custom_call.1} parent=11 // pred_check
          %p449 = pneg %p287
        $region42: #{tpu_custom_call.1} parent=11 // pred_check_branch
          %451 = sbr.rel (%p449) target = $region44
        $region43: #{tpu_custom_call.1} parent=11 // pred_region
          _
        $region44: #{tpu_custom_call.1} parent=11 // pred_fallthru
          _
        // Predicated region
        $region45: #{tpu_custom_call.1} parent=11 // pred_check
          %p452 = pneg %p308
        $region46: #{tpu_custom_call.1} parent=11 // pred_check_branch
          %454 = sbr.rel (%p452) target = $region48
        $region47: #{tpu_custom_call.1} parent=11 // pred_region
          _
        $region48: #{tpu_custom_call.1} parent=11 // pred_fallthru
          _
      $region12: #{tpu_custom_call.1} parent=5 // pred_fallthru
        _
      %p455 = scmp.lt.s32.totalorder %s30, 2
      // Predicated region
      $region49: #{tpu_custom_call.1} parent=5 // pred_check
        %p456 = pneg %p455
      $region50: #{tpu_custom_call.1} parent=5 // pred_check_branch
        %458 = sbr.rel (%p456) target = $region52
      $region51: #{tpu_custom_call.1} parent=5 // pred_region
        // Predicated region
        $region53: #{tpu_custom_call.1} parent=51 // pred_check
          %p459 = pneg %p62
        $region54: #{tpu_custom_call.1} parent=51 // pred_check_branch
          %461 = sbr.rel (%p459) target = $region56
        $region55: #{tpu_custom_call.1} parent=51 // pred_region
          %p462 = scmp.lt.s32.totalorder %s37, 1
          %s463 = scalar_select %p462, %s37, 1
          %s464 = smul.addr %s463, 8
          %s465 = scalar_lea.vmem %s0, %s464
        $region56: #{tpu_custom_call.1} parent=51 // pred_fallthru
          _
        // Predicated region
        $region57: #{tpu_custom_call.1} parent=51 // pred_check
          %p466 = pneg %p88
        $region58: #{tpu_custom_call.1} parent=51 // pred_check_branch
          %468 = sbr.rel (%p466) target = $region60
        $region59: #{tpu_custom_call.1} parent=51 // pred_region
          %s469 = sand.u32 %s78, 1
          %s470 = scalar_lea.sflag [#allocation6], %s469
          %s471 = sand.u32 %s78, 1
          %s472 = scalar_lea.vmem [#allocation5], %s471
          %474 = vsyncadd %s470, 0
          %s475 = scalar_lea.hbm %s1, %s37
          %s477 = sshll.u32 %s475, 4
          %s478 = int_to_ptr.hbm [resolvable:$true] %s477
          %s479 = sshll.u32 %s472, 4
          %s480 = int_to_ptr.vmem [resolvable:$true] %s479
          %482 = dma.hbm_to_vmem [thread:$0]  %s478, 16, %s480, %s470
        $region60: #{tpu_custom_call.1} parent=51 // pred_fallthru
          _
      $region52: #{tpu_custom_call.1} parent=5 // pred_fallthru
        _
      %p483 = scmp.le.s32.totalorder 1, %s30
      %p484 = scmp.lt.s32.totalorder %s30, 3
      %p485 = pnand %p483, %p484
      %p486 = pneg %p485
      // Predicated region
      $region61: #{tpu_custom_call.1} parent=5 // pred_check
        _
      $region62: #{tpu_custom_call.1} parent=5 // pred_check_branch
        %488 = sbr.rel (%p485) target = $region64
      $region63: #{tpu_custom_call.1} parent=5 // pred_region
        %s489 = ssub.s32 %s30, 1
        %s490 = sand.u32 %s81, 1
        %s491 = scalar_lea.sflag [#allocation6], %s490
        %s492 = sand.u32 %s81, 1
        %s493 = scalar_lea.vmem [#allocation5], %s492
        // Predicated region
        $region65: #{tpu_custom_call.1} parent=63 // pred_check
          %p494 = pneg %p94
        $region66: #{tpu_custom_call.1} parent=63 // pred_check_branch
          %496 = sbr.rel (%p494) target = $region68
        $region67: #{tpu_custom_call.1} parent=63 // pred_region
          %498 = dma.done %s491, 16
        $region68: #{tpu_custom_call.1} parent=63 // pred_fallthru
          _
        // Predicated region
        $region69: #{tpu_custom_call.1} parent=63 // pred_check
          %p499 = pneg %p172
        $region70: #{tpu_custom_call.1} parent=63 // pred_check_branch
          %501 = sbr.rel (%p499) target = $region72
        $region71: #{tpu_custom_call.1} parent=63 // pred_region
          %503 = dma.done [#allocation9], 256
        $region72: #{tpu_custom_call.1} parent=63 // pred_fallthru
          _
        // Predicated region
        $region73: #{tpu_custom_call.1} parent=63 // pred_check
          %p504 = pneg %p224
        $region74: #{tpu_custom_call.1} parent=63 // pred_check_branch
          %506 = sbr.rel (%p504) target = $region76
        $region75: #{tpu_custom_call.1} parent=63 // pred_region
          %508 = dma.done [#allocation9], 256
        $region76: #{tpu_custom_call.1} parent=63 // pred_fallthru
          _
        // Predicated region
        $region77: #{tpu_custom_call.1} parent=63 // pred_check
          %p509 = pneg %p245
        $region78: #{tpu_custom_call.1} parent=63 // pred_check_branch
          %511 = sbr.rel (%p509) target = $region80
        $region79: #{tpu_custom_call.1} parent=63 // pred_region
          %513 = dma.done [#allocation12], 256
        $region80: #{tpu_custom_call.1} parent=63 // pred_fallthru
          _
        %p514 = scmp.lt.s32.totalorder %s39, 1
        %s515 = scalar_select %p514, %s39, 1
        %s516 = smul.addr %s515, 8
        %s517 = scalar_lea.vmem %s0, %s516
        %p518 = pneg %p68
        %p519 = pneg %p65
        %s520 = sand.u32 %s81, 1
        %s521 = scalar_lea.sflag [#allocation6], %s520
        %s522 = sand.u32 %s81, 1
        %s523 = scalar_lea.vmem [#allocation5], %s522
        %p524 = pneg %p94
        %p525 = pneg %p91
        %p526 = scmp.lt.s32.totalorder %s40, 0
        %s527 = scalar_select %p526, %s40, 0
        %s528 = smul.addr %s527, 4
        %s529 = smul.addr %s528, 4
        %s530 = scalar_lea.vmem %s2, %s529
        %p531 = pneg %p120
        %p532 = pneg %p117
        %p533 = scmp.lt.s32.totalorder %s40, 0
        %s534 = scalar_select %p533, %s40, 0
        %s535 = smul.addr %s534, 4
        %s536 = smul.addr %s535, 4
        %s537 = scalar_lea.vmem %s3, %s536
        %p538 = pneg %p146
        %p539 = pneg %p143
        %p540 = pneg %p172
        %p541 = pneg %p169
        %p542 = scmp.lt.s32.totalorder %s40, 0
        %s543 = scalar_select %p542, %s40, 0
        %s544 = smul.addr %s543, 4
        %s545 = scalar_lea.vmem %s5, %s544
        %p546 = pneg %p198
        %p547 = pneg %p195
        %p548 = pneg %p224
        %p549 = pneg %p221
        %p550 = pneg %p245
        %p551 = pneg %p242
        %p552 = pneg %p266
        %p553 = pneg %p263
        %p554 = pneg %p287
        %p555 = pneg %p284
        %p556 = pneg %p308
        %p557 = pneg %p305
        %p558 = pneg %p334
        %p559 = pneg %p331
        %s560 = sand.u32 %s321, 1
        %s561 = scalar_lea.sflag [#allocation7], %s560
        %s562 = sand.u32 %s321, 1
        %s563 = smul.addr %s562, 8
        %s564 = scalar_lea.vmem [#allocation13], %s563
        %p565 = pneg %p360
        %p566 = pneg %p357
        %s567 = sand.u32 %s347, 1
        %s568 = scalar_lea.sflag [#allocation15], %s567
        %s569 = sand.u32 %s347, 1
        %s570 = smul.addr %s569, 8
        %s571 = scalar_lea.vmem [#allocation14], %s570
        %p572 = scmp.lt.s32.totalorder %s39, 1
        %s573 = scalar_select %p572, %s39, 1
        %s574 = smul.addr %s573, 8
        %s575 = scalar_lea.vmem %s0, %s574
        %p576 = scmp.lt.s32.totalorder %s40, 0
        %s577 = scalar_select %p576, %s40, 0
        %s578 = smul.addr %s577, 4
        %s579 = smul.addr %s578, 4
        %s580 = scalar_lea.vmem %s2, %s579
        %p581 = scmp.lt.s32.totalorder %s40, 0
        %s582 = scalar_select %p581, %s40, 0
        %s583 = smul.addr %s582, 4
        %s584 = smul.addr %s583, 4
        %s585 = scalar_lea.vmem %s3, %s584
        %p586 = scmp.lt.s32.totalorder %s40, 0
        %s587 = scalar_select %p586, %s40, 0
        %s588 = smul.addr %s587, 4
        %s589 = scalar_lea.vmem %s5, %s588
        %p591 = scmp.eq.s32.totalorder %s40, 0
        // Predicated region
        $region81: #{tpu_custom_call.1} parent=63 // pred_check
          %p592 = pneg %p591
        $region82: #{tpu_custom_call.1} parent=63 // pred_check_branch
          %594 = sbr.rel (%p592) target = $region84
        $region83: #{tpu_custom_call.1} parent=63 // pred_region
          %v595 = vld [vmem:[%s575] sm:$0xff]
          %v596 = vpack.c.bf16 %v595, %v595
          %vm597 = vcmask 257024
          %598 = vst.msk [vmem:[#allocation2] sm:$0xf] %vm597, %v596
          %vm599 = vcmask 261120
          %600 = vst.msk [vmem:[#allocation3] sm:$0xff] %vm599, 0.0
          %601 = vst [vmem:[#allocation4] sm:$0xff] 0.0
        $region84: #{tpu_custom_call.1} parent=63 // pred_fallthru
          _
        %v602 = vld [vmem:[#allocation2] sm:$0xf]
        %v603 = vld [vmem:[%s493] sm:$0x1]
        %v604 = vld [vmem:[%s589] sm:$0x7]
        %v605 = vld [vmem:[%s580] sm:$0xf]
        %v606 = vld [vmem:[%s580 + $0x4] sm:$0xf]
        %v607 = vld [vmem:[%s580 + $0x8] sm:$0xf]
        %v608 = vld [vmem:[%s580 + $0xc] sm:$0xf]
        %v609 = vperm.slane %v604, 0
        %v614 = vunpack.c.l.b16 %v605
        %v615 = vunpack.c.l.b16 %v606
        %v616 = vunpack.c.l.b16 %v607
        %v617 = vunpack.c.l.b16 %v608
        %v618 = vpack.c.b16 %v615, %v614
        %v619 = vpack.c.b16 %v617, %v616
        %vm622 = vcmask 261120
        %v624 = vsel %vm622, %v602, 0
        %626 = vmatpush.bf16.msra.mxu0 0
        %627 = vmatpush.bf16.msra.mxu0 0
        %628 = vmatpush.bf16.msra.mxu0 0
        %629 = vmatpush.bf16.msra.mxu0 0
        %630 = vmatpush.bf16.msra.mxu0 0
        %631 = vmatpush.bf16.msra.mxu0 0
        %632 = vmatpush.bf16.msra.mxu0 %v619
        %633 = vmatpush.bf16.msra.mxu0 %v618
        %634 = vmatmul.bf16.gmra.mxu0 %v624
        %v635 = vpop.f32.mrf.mxu0
        %v636 = vadd.f32 %v609, %v635
        %v637 = vpop.f32.mrf.mxu0
        %638 = vdwg.mxu0
        %v639 = vld [vmem:[%s585] sm:$0xf]
        %v640 = vld [vmem:[%s585 + $0x4] sm:$0xf]
        %v641 = vld [vmem:[%s585 + $0x8] sm:$0xf]
        %v642 = vld [vmem:[%s585 + $0xc] sm:$0xf]
        %v643 = vperm.slane %v604, 1
        %v648 = vunpack.c.l.b16 %v639
        %v649 = vunpack.c.l.b16 %v640
        %v650 = vunpack.c.l.b16 %v641
        %v651 = vunpack.c.l.b16 %v642
        %v652 = vpack.c.b16 %v649, %v648
        %v653 = vpack.c.b16 %v651, %v650
        %656 = vmatpush.bf16.msra.mxu0 0
        %657 = vmatpush.bf16.msra.mxu0 0
        %658 = vmatpush.bf16.msra.mxu0 0
        %659 = vmatpush.bf16.msra.mxu0 0
        %660 = vmatpush.bf16.msra.mxu0 0
        %661 = vmatpush.bf16.msra.mxu0 0
        %662 = vmatpush.bf16.msra.mxu0 %v653
        %663 = vmatpush.bf16.msra.mxu0 %v652
        %664 = vmatmul.bf16.gmra.mxu0 %v624
        %v665 = vpop.f32.mrf.mxu0
        %v666 = vadd.f32 %v643, %v665
        %v667 = vpop.f32.mrf.mxu0
        %668 = vdwg.mxu0
        %v669 = vld [vmem:[#allocation8] sm:$0xf]
        %v670 = vld [vmem:[#allocation8 + $0x4] sm:$0xf]
        %v671 = vld [vmem:[#allocation8 + $0x8] sm:$0xf]
        %v672 = vld [vmem:[#allocation8 + $0xc] sm:$0xf]
        %v673 = vperm.slane %v604, 2
        %v678 = vunpack.c.l.b16 %v669
        %v679 = vunpack.c.l.b16 %v670
        %v680 = vunpack.c.l.b16 %v671
        %v681 = vunpack.c.l.b16 %v672
        %v682 = vpack.c.b16 %v679, %v678
        %v683 = vpack.c.b16 %v681, %v680
        %686 = vmatpush.bf16.msra.mxu0 0
        %687 = vmatpush.bf16.msra.mxu0 0
        %688 = vmatpush.bf16.msra.mxu0 0
        %689 = vmatpush.bf16.msra.mxu0 0
        %690 = vmatpush.bf16.msra.mxu0 0
        %691 = vmatpush.bf16.msra.mxu0 0
        %692 = vmatpush.bf16.msra.mxu0 %v683
        %693 = vmatpush.bf16.msra.mxu0 %v682
        %694 = vmatmul.bf16.gmra.mxu0 %v624
        %v695 = vpop.f32.mrf.mxu0
        %v696 = vadd.f32 %v673, %v695
        %v697 = vpop.f32.mrf.mxu0
        %698 = vdwg.mxu0
        %700 = vrot.lane.b32.xlu0 %v636, 120
        %v701 = vpop.permute.xlu0 %700
        %703 = vrot.lane.b32.xlu0 %v636, 112
        %v704 = vpop.permute.xlu0 %703
        %706 = vrot.lane.b32.xlu0 %v636, 104
        %v707 = vpop.permute.xlu0 %706
        %v709 = vrot.slane %v704, 4
        %vm710 = vcmask 1047556
        %v711 = vsel %vm710, %v709, %v636
        %v712 = vrot.slane %v636, 4
        %v713 = vsel %vm710, %v704, %v712
        %v715 = vunpack.c.l.s4 1983009808
        %v716 = vunpack.c.0.s8 %v715
        %v717 = vperm.slane %v711, %v716
        %v719 = vunpack.c.l.s4 1983009808
        %v720 = vunpack.c.0.s8 %v719
        %v721 = vperm.slane %v713, %v720
        %v722 = vrot.slane %v707, 4
        %v723 = vsel %vm710, %v722, %v701
        %v724 = vrot.slane %v701, 4
        %v725 = vsel %vm710, %v707, %v724
        %v727 = vunpack.c.l.s4 1983009808
        %v728 = vunpack.c.0.s8 %v727
        %v729 = vperm.slane %v723, %v728
        %v731 = vunpack.c.l.s4 1983009808
        %v732 = vunpack.c.0.s8 %v731
        %v733 = vperm.slane %v725, %v732
        %v734 = vrot.slane %v729, 4
        %v735 = vsel %vm710, %v734, %v717
        %v736 = vrot.slane %v717, 4
        %v737 = vsel %vm710, %v729, %v736
        %v739 = vunpack.c.l.s4 1934713408
        %v740 = vunpack.c.0.s8 %v739
        %v741 = vperm.slane %v735, %v740
        %v743 = vunpack.c.l.s4 1934713408
        %v744 = vunpack.c.0.s8 %v743
        %v745 = vperm.slane %v737, %v744
        %v746 = vrot.slane %v733, 4
        %v747 = vsel %vm710, %v746, %v721
        %v748 = vrot.slane %v721, 4
        %v749 = vsel %vm710, %v733, %v748
        %v751 = vunpack.c.l.s4 1934713408
        %v752 = vunpack.c.0.s8 %v751
        %v753 = vperm.slane %v747, %v752
        %v755 = vunpack.c.l.s4 1934713408
        %v756 = vunpack.c.0.s8 %v755
        %v757 = vperm.slane %v749, %v756
        %v758 = vrot.slane %v741, 4
        %v759 = vsel %vm710, 0.0, %v758
        %v760 = vrot.slane %v745, 4
        %v761 = vsel %vm710, 0.0, %v760
        %v762 = vrot.slane %v753, 4
        %v763 = vsel %vm710, 0.0, %v762
        %v764 = vrot.slane %v757, 4
        %v765 = vsel %vm710, 0.0, %v764
        %v766 = vpack.c.bf16 %v741, %v741
        %v767 = vpack.c.bf16 %v759, %v759
        %v768 = vpack.c.bf16 %v745, %v745
        %v769 = vpack.c.bf16 %v761, %v761
        %v770 = vpack.c.bf16 %v753, %v753
        %v771 = vpack.c.bf16 %v763, %v763
        %v772 = vpack.c.bf16 %v757, %v757
        %v773 = vpack.c.bf16 %v765, %v765
        %775 = vrot.lane.b32.xlu0 %v666, 120
        %v776 = vpop.permute.xlu0 %775
        %778 = vrot.lane.b32.xlu0 %v666, 112
        %v779 = vpop.permute.xlu0 %778
        %781 = vrot.lane.b32.xlu0 %v666, 104
        %v782 = vpop.permute.xlu0 %781
        %v784 = vrot.slane %v779, 4
        %v785 = vsel %vm710, %v784, %v666
        %v786 = vrot.slane %v666, 4
        %v787 = vsel %vm710, %v779, %v786
        %v789 = vunpack.c.l.s4 1983009808
        %v790 = vunpack.c.0.s8 %v789
        %v791 = vperm.slane %v785, %v790
        %v793 = vunpack.c.l.s4 1983009808
        %v794 = vunpack.c.0.s8 %v793
        %v795 = vperm.slane %v787, %v794
        %v796 = vrot.slane %v782, 4
        %v797 = vsel %vm710, %v796, %v776
        %v798 = vrot.slane %v776, 4
        %v799 = vsel %vm710, %v782, %v798
        %v801 = vunpack.c.l.s4 1983009808
        %v802 = vunpack.c.0.s8 %v801
        %v803 = vperm.slane %v797, %v802
        %v805 = vunpack.c.l.s4 1983009808
        %v806 = vunpack.c.0.s8 %v805
        %v807 = vperm.slane %v799, %v806
        %v808 = vrot.slane %v803, 4
        %v809 = vsel %vm710, %v808, %v791
        %v810 = vrot.slane %v791, 4
        %v811 = vsel %vm710, %v803, %v810
        %v813 = vunpack.c.l.s4 1934713408
        %v814 = vunpack.c.0.s8 %v813
        %v815 = vperm.slane %v809, %v814
        %v817 = vunpack.c.l.s4 1934713408
        %v818 = vunpack.c.0.s8 %v817
        %v819 = vperm.slane %v811, %v818
        %v820 = vrot.slane %v807, 4
        %v821 = vsel %vm710, %v820, %v795
        %v822 = vrot.slane %v795, 4
        %v823 = vsel %vm710, %v807, %v822
        %v825 = vunpack.c.l.s4 1934713408
        %v826 = vunpack.c.0.s8 %v825
        %v827 = vperm.slane %v821, %v826
        %v829 = vunpack.c.l.s4 1934713408
        %v830 = vunpack.c.0.s8 %v829
        %v831 = vperm.slane %v823, %v830
        %v832 = vrot.slane %v815, 4
        %v833 = vsel %vm710, 0.0, %v832
        %v834 = vrot.slane %v819, 4
        %v835 = vsel %vm710, 0.0, %v834
        %v836 = vrot.slane %v827, 4
        %v837 = vsel %vm710, 0.0, %v836
        %v838 = vrot.slane %v831, 4
        %v839 = vsel %vm710, 0.0, %v838
        %v840 = vpack.c.bf16 %v815, %v815
        %v841 = vpack.c.bf16 %v833, %v833
        %v842 = vpack.c.bf16 %v819, %v819
        %v843 = vpack.c.bf16 %v835, %v835
        %v844 = vpack.c.bf16 %v827, %v827
        %v845 = vpack.c.bf16 %v837, %v837
        %v846 = vpack.c.bf16 %v831, %v831
        %v847 = vpack.c.bf16 %v839, %v839
        %849 = vrot.lane.b32.xlu0 %v696, 120
        %v850 = vpop.permute.xlu0 %849
        %852 = vrot.lane.b32.xlu0 %v696, 112
        %v853 = vpop.permute.xlu0 %852
        %855 = vrot.lane.b32.xlu0 %v696, 104
        %v856 = vpop.permute.xlu0 %855
        %v858 = vrot.slane %v853, 4
        %v859 = vsel %vm710, %v858, %v696
        %v860 = vrot.slane %v696, 4
        %v861 = vsel %vm710, %v853, %v860
        %v863 = vunpack.c.l.s4 1983009808
        %v864 = vunpack.c.0.s8 %v863
        %v865 = vperm.slane %v859, %v864
        %v867 = vunpack.c.l.s4 1983009808
        %v868 = vunpack.c.0.s8 %v867
        %v869 = vperm.slane %v861, %v868
        %v870 = vrot.slane %v856, 4
        %v871 = vsel %vm710, %v870, %v850
        %v872 = vrot.slane %v850, 4
        %v873 = vsel %vm710, %v856, %v872
        %v875 = vunpack.c.l.s4 1983009808
        %v876 = vunpack.c.0.s8 %v875
        %v877 = vperm.slane %v871, %v876
        %v879 = vunpack.c.l.s4 1983009808
        %v880 = vunpack.c.0.s8 %v879
        %v881 = vperm.slane %v873, %v880
        %v882 = vrot.slane %v877, 4
        %v883 = vsel %vm710, %v882, %v865
        %v884 = vrot.slane %v865, 4
        %v885 = vsel %vm710, %v877, %v884
        %v887 = vunpack.c.l.s4 1934713408
        %v888 = vunpack.c.0.s8 %v887
        %v889 = vperm.slane %v883, %v888
        %v891 = vunpack.c.l.s4 1934713408
        %v892 = vunpack.c.0.s8 %v891
        %v893 = vperm.slane %v885, %v892
        %v894 = vrot.slane %v881, 4
        %v895 = vsel %vm710, %v894, %v869
        %v896 = vrot.slane %v869, 4
        %v897 = vsel %vm710, %v881, %v896
        %v899 = vunpack.c.l.s4 1934713408
        %v900 = vunpack.c.0.s8 %v899
        %v901 = vperm.slane %v895, %v900
        %v903 = vunpack.c.l.s4 1934713408
        %v904 = vunpack.c.0.s8 %v903
        %v905 = vperm.slane %v897, %v904
        %v906 = vrot.slane %v889, 4
        %v907 = vsel %vm710, 0.0, %v906
        %v908 = vrot.slane %v893, 4
        %v909 = vsel %vm710, 0.0, %v908
        %v910 = vrot.slane %v901, 4
        %v911 = vsel %vm710, 0.0, %v910
        %v912 = vrot.slane %v905, 4
        %v913 = vsel %vm710, 0.0, %v912
        %v914 = vpack.c.bf16 %v889, %v889
        %v915 = vpack.c.bf16 %v907, %v907
        %v916 = vpack.c.bf16 %v893, %v893
        %v917 = vpack.c.bf16 %v909, %v909
        %v918 = vpack.c.bf16 %v901, %v901
        %v919 = vpack.c.bf16 %v911, %v911
        %v920 = vpack.c.bf16 %v905, %v905
        %v921 = vpack.c.bf16 %v913, %v913
        %v923 = vperm.slane %v603, 0
        %v925 = vrot.slane %v770, 4
        %vm926 = vcmask 1047556
        %v927 = vsel %vm926, %v925, %v766
        %v929 = vunpack.c.l.s4 1983009808
        %v930 = vunpack.c.0.s8 %v929
        %v931 = vperm.slane %v927, %v930
        %v932 = vrot.slane %v772, 4
        %v933 = vsel %vm926, %v932, %v768
        %v935 = vunpack.c.l.s4 1983009808
        %v936 = vunpack.c.0.s8 %v935
        %v937 = vperm.slane %v933, %v936
        %v938 = vrot.slane %v937, 4
        %v939 = vsel %vm926, %v938, %v931
        %v941 = vunpack.c.l.s4 1934713408
        %v942 = vunpack.c.0.s8 %v941
        %v943 = vperm.slane %v939, %v942
        %v944 = vrot.slane %v943, 4
        %v945 = vsel %vm926, 0, %v944
        %v946 = vrot.slane %v771, 4
        %v947 = vsel %vm926, %v946, %v767
        %v949 = vunpack.c.l.s4 1983009808
        %v950 = vunpack.c.0.s8 %v949
        %v951 = vperm.slane %v947, %v950
        %v952 = vrot.slane %v773, 4
        %v953 = vsel %vm926, %v952, %v769
        %v955 = vunpack.c.l.s4 1983009808
        %v956 = vunpack.c.0.s8 %v955
        %v957 = vperm.slane %v953, %v956
        %v958 = vrot.slane %v957, 4
        %v959 = vsel %vm926, %v958, %v951
        %v961 = vunpack.c.l.s4 1934713408
        %v962 = vunpack.c.0.s8 %v961
        %v963 = vperm.slane %v959, %v962
        %v964 = vrot.slane %v963, 4
        %v965 = vsel %vm926, 0, %v964
        %v968 = vpack.i.b16 %v963, %v943
        %v969 = vshrl.u32 %v943, 16
        %v970 = vshrl.u32 %v963, 16
        %v971 = vpack.i.b16 %v970, %v969
        %v974 = vpack.i.b16 %v965, %v945
        %v975 = vshrl.u32 %v945, 16
        %v976 = vshrl.u32 %v965, 16
        %v977 = vpack.i.b16 %v976, %v975
        %978 = vxpose.xlu0.c.b16.start [1/8] %v840, 128
        %979 = vxpose.xlu0.c.b16.cont [2/8] 0, 128
        %980 = vxpose.xlu0.c.b16.cont [3/8] 0, 128
        %981 = vxpose.xlu0.c.b16.cont [4/8] 0, 128
        %982 = vxpose.xlu0.c.b16.cont [5/8] 0, 128
        %983 = vxpose.xlu0.c.b16.cont [6/8] 0, 128
        %984 = vxpose.xlu0.c.b16.cont [7/8] 0, 128
        %985 = vxpose.xlu0.c.b16.end [8/8] 0, 128
        %v986 = vpop.trf.xlu0
        %v987 = vpop.trf.xlu0
        %v988 = vpop.trf.xlu0
        %v989 = vpop.trf.xlu0
        %v990 = vpop.trf.xlu0
        %v991 = vpop.trf.xlu0
        %v992 = vpop.trf.xlu0
        %v993 = vpop.trf.xlu0
        %994 = vxpose.xlu0.c.b16.start [1/8] %v841, 128
        %995 = vxpose.xlu0.c.b16.cont [2/8] 0, 128
        %996 = vxpose.xlu0.c.b16.cont [3/8] 0, 128
        %997 = vxpose.xlu0.c.b16.cont [4/8] 0, 128
        %998 = vxpose.xlu0.c.b16.cont [5/8] 0, 128
        %999 = vxpose.xlu0.c.b16.cont [6/8] 0, 128
        %1000 = vxpose.xlu0.c.b16.cont [7/8] 0, 128
        %1001 = vxpose.xlu0.c.b16.end [8/8] 0, 128
        %v1002 = vpop.trf.xlu0
        %v1003 = vpop.trf.xlu0
        %v1004 = vpop.trf.xlu0
        %v1005 = vpop.trf.xlu0
        %v1006 = vpop.trf.xlu0
        %v1007 = vpop.trf.xlu0
        %v1008 = vpop.trf.xlu0
        %v1009 = vpop.trf.xlu0
        %1010 = vxpose.xlu0.c.b16.start [1/8] %v842, 128
        %1011 = vxpose.xlu0.c.b16.cont [2/8] 0, 128
        %1012 = vxpose.xlu0.c.b16.cont [3/8] 0, 128
        %1013 = vxpose.xlu0.c.b16.cont [4/8] 0, 128
        %1014 = vxpose.xlu0.c.b16.cont [5/8] 0, 128
        %1015 = vxpose.xlu0.c.b16.cont [6/8] 0, 128
        %1016 = vxpose.xlu0.c.b16.cont [7/8] 0, 128
        %1017 = vxpose.xlu0.c.b16.end [8/8] 0, 128
        %v1018 = vpop.trf.xlu0
        %v1019 = vpop.trf.xlu0
        %v1020 = vpop.trf.xlu0
        %v1021 = vpop.trf.xlu0
        %v1022 = vpop.trf.xlu0
        %v1023 = vpop.trf.xlu0
        %v1024 = vpop.trf.xlu0
        %v1025 = vpop.trf.xlu0
        %1026 = vxpose.xlu0.c.b16.start [1/8] %v843, 128
        %1027 = vxpose.xlu0.c.b16.cont [2/8] 0, 128
        %1028 = vxpose.xlu0.c.b16.cont [3/8] 0, 128
        %1029 = vxpose.xlu0.c.b16.cont [4/8] 0, 128
        %1030 = vxpose.xlu0.c.b16.cont [5/8] 0, 128
        %1031 = vxpose.xlu0.c.b16.cont [6/8] 0, 128
        %1032 = vxpose.xlu0.c.b16.cont [7/8] 0, 128
        %1033 = vxpose.xlu0.c.b16.end [8/8] 0, 128
        %v1034 = vpop.trf.xlu0
        %v1035 = vpop.trf.xlu0
        %v1036 = vpop.trf.xlu0
        %v1037 = vpop.trf.xlu0
        %v1038 = vpop.trf.xlu0
        %v1039 = vpop.trf.xlu0
        %v1040 = vpop.trf.xlu0
        %v1041 = vpop.trf.xlu0
        %1042 = vxpose.xlu0.c.b16.start [1/8] %v844, 128
        %1043 = vxpose.xlu0.c.b16.cont [2/8] 0, 128
        %1044 = vxpose.xlu0.c.b16.cont [3/8] 0, 128
        %1045 = vxpose.xlu0.c.b16.cont [4/8] 0, 128
        %1046 = vxpose.xlu0.c.b16.cont [5/8] 0, 128
        %1047 = vxpose.xlu0.c.b16.cont [6/8] 0, 128
        %1048 = vxpose.xlu0.c.b16.cont [7/8] 0, 128
        %1049 = vxpose.xlu0.c.b16.end [8/8] 0, 128
        %v1050 = vpop.trf.xlu0
        %v1051 = vpop.trf.xlu0
        %v1052 = vpop.trf.xlu0
        %v1053 = vpop.trf.xlu0
        %v1054 = vpop.trf.xlu0
        %v1055 = vpop.trf.xlu0
        %v1056 = vpop.trf.xlu0
        %v1057 = vpop.trf.xlu0
        %1058 = vxpose.xlu0.c.b16.start [1/8] %v845, 128
        %1059 = vxpose.xlu0.c.b16.cont [2/8] 0, 128
        %1060 = vxpose.xlu0.c.b16.cont [3/8] 0, 128
        %1061 = vxpose.xlu0.c.b16.cont [4/8] 0, 128
        %1062 = vxpose.xlu0.c.b16.cont [5/8] 0, 128
        %1063 = vxpose.xlu0.c.b16.cont [6/8] 0, 128
        %1064 = vxpose.xlu0.c.b16.cont [7/8] 0, 128
        %1065 = vxpose.xlu0.c.b16.end [8/8] 0, 128
        %v1066 = vpop.trf.xlu0
        %v1067 = vpop.trf.xlu0
        %v1068 = vpop.trf.xlu0
        %v1069 = vpop.trf.xlu0
        %v1070 = vpop.trf.xlu0
        %v1071 = vpop.trf.xlu0
        %v1072 = vpop.trf.xlu0
        %v1073 = vpop.trf.xlu0
        %1074 = vxpose.xlu0.c.b16.start [1/8] %v846, 128
        %1075 = vxpose.xlu0.c.b16.cont [2/8] 0, 128
        %1076 = vxpose.xlu0.c.b16.cont [3/8] 0, 128
        %1077 = vxpose.xlu0.c.b16.cont [4/8] 0, 128
        %1078 = vxpose.xlu0.c.b16.cont [5/8] 0, 128
        %1079 = vxpose.xlu0.c.b16.cont [6/8] 0, 128
        %1080 = vxpose.xlu0.c.b16.cont [7/8] 0, 128
        %1081 = vxpose.xlu0.c.b16.end [8/8] 0, 128
        %v1082 = vpop.trf.xlu0
        %v1083 = vpop.trf.xlu0
        %v1084 = vpop.trf.xlu0
        %v1085 = vpop.trf.xlu0
        %v1086 = vpop.trf.xlu0
        %v1087 = vpop.trf.xlu0
        %v1088 = vpop.trf.xlu0
        %v1089 = vpop.trf.xlu0
        %1090 = vxpose.xlu0.c.b16.start [1/8] %v847, 128
        %1091 = vxpose.xlu0.c.b16.cont [2/8] 0, 128
        %1092 = vxpose.xlu0.c.b16.cont [3/8] 0, 128
        %1093 = vxpose.xlu0.c.b16.cont [4/8] 0, 128
        %1094 = vxpose.xlu0.c.b16.cont [5/8] 0, 128
        %1095 = vxpose.xlu0.c.b16.cont [6/8] 0, 128
        %1096 = vxpose.xlu0.c.b16.cont [7/8] 0, 128
        %1097 = vxpose.xlu0.c.b16.end [8/8] 0, 128
        %v1098 = vpop.trf.xlu0
        %v1099 = vpop.trf.xlu0
        %v1100 = vpop.trf.xlu0
        %v1101 = vpop.trf.xlu0
        %v1102 = vpop.trf.xlu0
        %v1103 = vpop.trf.xlu0
        %v1104 = vpop.trf.xlu0
        %v1105 = vpop.trf.xlu0
        %v1106 = vrot.slane %v1050, 4
        %v1107 = vsel %vm926, %v1106, %v986
        %v1109 = vunpack.c.l.s4 1983009808
        %v1110 = vunpack.c.0.s8 %v1109
        %v1111 = vperm.slane %v1107, %v1110
        %v1112 = vrot.slane %v1082, 4
        %v1113 = vsel %vm926, %v1112, %v1018
        %v1115 = vunpack.c.l.s4 1983009808
        %v1116 = vunpack.c.0.s8 %v1115
        %v1117 = vperm.slane %v1113, %v1116
        %v1118 = vrot.slane %v1117, 4
        %v1119 = vsel %vm926, %v1118, %v1111
        %v1120 = vrot.slane %v1111, 4
        %v1121 = vsel %vm926, %v1117, %v1120
        %v1123 = vunpack.c.l.s4 1934713408
        %v1124 = vunpack.c.0.s8 %v1123
        %v1125 = vperm.slane %v1119, %v1124
        %v1127 = vunpack.c.l.s4 1934713408
        %v1128 = vunpack.c.0.s8 %v1127
        %v1129 = vperm.slane %v1121, %v1128
        %v1130 = vrot.slane %v1125, 4
        %v1131 = vsel %vm926, 0, %v1130
        %v1132 = vrot.slane %v1129, 4
        %v1133 = vsel %vm926, 0, %v1132
        %v1134 = vrot.slane %v1066, 4
        %v1135 = vsel %vm926, %v1134, %v1002
        %v1137 = vunpack.c.l.s4 1983009808
        %v1138 = vunpack.c.0.s8 %v1137
        %v1139 = vperm.slane %v1135, %v1138
        %v1140 = vrot.slane %v1098, 4
        %v1141 = vsel %vm926, %v1140, %v1034
        %v1143 = vunpack.c.l.s4 1983009808
        %v1144 = vunpack.c.0.s8 %v1143
        %v1145 = vperm.slane %v1141, %v1144
        %v1146 = vrot.slane %v1145, 4
        %v1147 = vsel %vm926, %v1146, %v1139
        %v1148 = vrot.slane %v1139, 4
        %v1149 = vsel %vm926, %v1145, %v1148
        %v1151 = vunpack.c.l.s4 1934713408
        %v1152 = vunpack.c.0.s8 %v1151
        %v1153 = vperm.slane %v1147, %v1152
        %v1155 = vunpack.c.l.s4 1934713408
        %v1156 = vunpack.c.0.s8 %v1155
        %v1157 = vperm.slane %v1149, %v1156
        %v1158 = vrot.slane %v1153, 4
        %v1159 = vsel %vm926, 0, %v1158
        %v1160 = vrot.slane %v1157, 4
        %v1161 = vsel %vm926, 0, %v1160
        %v1164 = vpack.i.b16 %v1153, %v1125
        %v1166 = vshrl.u32 %v1125, 16
        %v1167 = vshrl.u32 %v1153, 16
        %v1168 = vpack.i.b16 %v1167, %v1166
        %v1172 = vpack.i.b16 %v1159, %v1131
        %v1174 = vshrl.u32 %v1131, 16
        %v1175 = vshrl.u32 %v1159, 16
        %v1176 = vpack.i.b16 %v1175, %v1174
        %v1180 = vpack.i.b16 %v1157, %v1129
        %v1182 = vshrl.u32 %v1129, 16
        %v1183 = vshrl.u32 %v1157, 16
        %v1184 = vpack.i.b16 %v1183, %v1182
        %v1188 = vpack.i.b16 %v1161, %v1133
        %v1190 = vshrl.u32 %v1133, 16
        %v1191 = vshrl.u32 %v1161, 16
        %v1192 = vpack.i.b16 %v1191, %v1190
        %1194 = vxpose.xlu0.c.b16.start [1/8] %v1164, 128
        %1195 = vxpose.xlu0.c.b16.cont [2/8] 0, 128
        %1196 = vxpose.xlu0.c.b16.cont [3/8] 0, 128
        %1197 = vxpose.xlu0.c.b16.cont [4/8] 0, 128
        %1198 = vxpose.xlu0.c.b16.cont [5/8] 0, 128
        %1199 = vxpose.xlu0.c.b16.cont [6/8] 0, 128
        %1200 = vxpose.xlu0.c.b16.cont [7/8] 0, 128
        %1201 = vxpose.xlu0.c.b16.end [8/8] 0, 128
        %v1202 = vpop.trf.xlu0
        %v1203 = vpop.trf.xlu0
        %v1204 = vpop.trf.xlu0
        %v1205 = vpop.trf.xlu0
        %v1206 = vpop.trf.xlu0
        %v1207 = vpop.trf.xlu0
        %v1208 = vpop.trf.xlu0
        %v1209 = vpop.trf.xlu0
        %1210 = vxpose.xlu0.c.b16.start [1/8] %v1168, 128
        %1211 = vxpose.xlu0.c.b16.cont [2/8] 0, 128
        %1212 = vxpose.xlu0.c.b16.cont [3/8] 0, 128
        %1213 = vxpose.xlu0.c.b16.cont [4/8] 0, 128
        %1214 = vxpose.xlu0.c.b16.cont [5/8] 0, 128
        %1215 = vxpose.xlu0.c.b16.cont [6/8] 0, 128
        %1216 = vxpose.xlu0.c.b16.cont [7/8] 0, 128
        %1217 = vxpose.xlu0.c.b16.end [8/8] 0, 128
        %v1218 = vpop.trf.xlu0
        %v1219 = vpop.trf.xlu0
        %v1220 = vpop.trf.xlu0
        %v1221 = vpop.trf.xlu0
        %v1222 = vpop.trf.xlu0
        %v1223 = vpop.trf.xlu0
        %v1224 = vpop.trf.xlu0
        %v1225 = vpop.trf.xlu0
        %1226 = vxpose.xlu0.c.b16.start [1/8] %v1172, 128
        %1227 = vxpose.xlu0.c.b16.cont [2/8] 0, 128
        %1228 = vxpose.xlu0.c.b16.cont [3/8] 0, 128
        %1229 = vxpose.xlu0.c.b16.cont [4/8] 0, 128
        %1230 = vxpose.xlu0.c.b16.cont [5/8] 0, 128
        %1231 = vxpose.xlu0.c.b16.cont [6/8] 0, 128
        %1232 = vxpose.xlu0.c.b16.cont [7/8] 0, 128
        %1233 = vxpose.xlu0.c.b16.end [8/8] 0, 128
        %v1234 = vpop.trf.xlu0
        %v1235 = vpop.trf.xlu0
        %v1236 = vpop.trf.xlu0
        %v1237 = vpop.trf.xlu0
        %v1238 = vpop.trf.xlu0
        %v1239 = vpop.trf.xlu0
        %v1240 = vpop.trf.xlu0
        %v1241 = vpop.trf.xlu0
        %1242 = vxpose.xlu0.c.b16.start [1/8] %v1176, 128
        %1243 = vxpose.xlu0.c.b16.cont [2/8] 0, 128
        %1244 = vxpose.xlu0.c.b16.cont [3/8] 0, 128
        %1245 = vxpose.xlu0.c.b16.cont [4/8] 0, 128
        %1246 = vxpose.xlu0.c.b16.cont [5/8] 0, 128
        %1247 = vxpose.xlu0.c.b16.cont [6/8] 0, 128
        %1248 = vxpose.xlu0.c.b16.cont [7/8] 0, 128
        %1249 = vxpose.xlu0.c.b16.end [8/8] 0, 128
        %v1250 = vpop.trf.xlu0
        %v1251 = vpop.trf.xlu0
        %v1252 = vpop.trf.xlu0
        %v1253 = vpop.trf.xlu0
        %v1254 = vpop.trf.xlu0
        %v1255 = vpop.trf.xlu0
        %v1256 = vpop.trf.xlu0
        %v1257 = vpop.trf.xlu0
        %1258 = vxpose.xlu0.c.b16.start [1/8] %v1180, 128
        %1259 = vxpose.xlu0.c.b16.cont [2/8] 0, 128
        %1260 = vxpose.xlu0.c.b16.cont [3/8] 0, 128
        %1261 = vxpose.xlu0.c.b16.cont [4/8] 0, 128
        %1262 = vxpose.xlu0.c.b16.cont [5/8] 0, 128
        %1263 = vxpose.xlu0.c.b16.cont [6/8] 0, 128
        %1264 = vxpose.xlu0.c.b16.cont [7/8] 0, 128
        %1265 = vxpose.xlu0.c.b16.end [8/8] 0, 128
        %v1266 = vpop.trf.xlu0
        %v1267 = vpop.trf.xlu0
        %v1268 = vpop.trf.xlu0
        %v1269 = vpop.trf.xlu0
        %v1270 = vpop.trf.xlu0
        %v1271 = vpop.trf.xlu0
        %v1272 = vpop.trf.xlu0
        %v1273 = vpop.trf.xlu0
        %1274 = vxpose.xlu0.c.b16.start [1/8] %v1184, 128
        %1275 = vxpose.xlu0.c.b16.cont [2/8] 0, 128
        %1276 = vxpose.xlu0.c.b16.cont [3/8] 0, 128
        %1277 = vxpose.xlu0.c.b16.cont [4/8] 0, 128
        %1278 = vxpose.xlu0.c.b16.cont [5/8] 0, 128
        %1279 = vxpose.xlu0.c.b16.cont [6/8] 0, 128
        %1280 = vxpose.xlu0.c.b16.cont [7/8] 0, 128
        %1281 = vxpose.xlu0.c.b16.end [8/8] 0, 128
        %v1282 = vpop.trf.xlu0
        %v1283 = vpop.trf.xlu0
        %v1284 = vpop.trf.xlu0
        %v1285 = vpop.trf.xlu0
        %v1286 = vpop.trf.xlu0
        %v1287 = vpop.trf.xlu0
        %v1288 = vpop.trf.xlu0
        %v1289 = vpop.trf.xlu0
        %1290 = vxpose.xlu0.c.b16.start [1/8] %v1188, 128
        %1291 = vxpose.xlu0.c.b16.cont [2/8] 0, 128
        %1292 = vxpose.xlu0.c.b16.cont [3/8] 0, 128
        %1293 = vxpose.xlu0.c.b16.cont [4/8] 0, 128
        %1294 = vxpose.xlu0.c.b16.cont [5/8] 0, 128
        %1295 = vxpose.xlu0.c.b16.cont [6/8] 0, 128
        %1296 = vxpose.xlu0.c.b16.cont [7/8] 0, 128
        %1297 = vxpose.xlu0.c.b16.end [8/8] 0, 128
        %v1298 = vpop.trf.xlu0
        %v1299 = vpop.trf.xlu0
        %v1300 = vpop.trf.xlu0
        %v1301 = vpop.trf.xlu0
        %v1302 = vpop.trf.xlu0
        %v1303 = vpop.trf.xlu0
        %v1304 = vpop.trf.xlu0
        %v1305 = vpop.trf.xlu0
        %1306 = vxpose.xlu0.c.b16.start [1/8] %v1192, 128
        %1307 = vxpose.xlu0.c.b16.cont [2/8] 0, 128
        %1308 = vxpose.xlu0.c.b16.cont [3/8] 0, 128
        %1309 = vxpose.xlu0.c.b16.cont [4/8] 0, 128
        %1310 = vxpose.xlu0.c.b16.cont [5/8] 0, 128
        %1311 = vxpose.xlu0.c.b16.cont [6/8] 0, 128
        %1312 = vxpose.xlu0.c.b16.cont [7/8] 0, 128
        %1313 = vxpose.xlu0.c.b16.end [8/8] 0, 128
        %v1314 = vpop.trf.xlu0
        %v1315 = vpop.trf.xlu0
        %v1316 = vpop.trf.xlu0
        %v1317 = vpop.trf.xlu0
        %v1318 = vpop.trf.xlu0
        %v1319 = vpop.trf.xlu0
        %v1320 = vpop.trf.xlu0
        %v1321 = vpop.trf.xlu0
        %v1322 = vrot.slane %v1266, 4
        %v1323 = vsel %vm926, %v1322, %v1202
        %v1325 = vunpack.c.l.s4 1983009808
        %v1326 = vunpack.c.0.s8 %v1325
        %v1327 = vperm.slane %v1323, %v1326
        %v1328 = vrot.slane %v1298, 4
        %v1329 = vsel %vm926, %v1328, %v1234
        %v1331 = vunpack.c.l.s4 1983009808
        %v1332 = vunpack.c.0.s8 %v1331
        %v1333 = vperm.slane %v1329, %v1332
        %v1334 = vrot.slane %v1333, 4
        %v1335 = vsel %vm926, %v1334, %v1327
        %v1337 = vunpack.c.l.s4 1934713408
        %v1338 = vunpack.c.0.s8 %v1337
        %v1339 = vperm.slane %v1335, %v1338
        %v1340 = vrot.slane %v1339, 4
        %v1341 = vsel %vm926, 0, %v1340
        %v1342 = vrot.slane %v1282, 4
        %v1343 = vsel %vm926, %v1342, %v1218
        %v1345 = vunpack.c.l.s4 1983009808
        %v1346 = vunpack.c.0.s8 %v1345
        %v1347 = vperm.slane %v1343, %v1346
        %v1348 = vrot.slane %v1314, 4
        %v1349 = vsel %vm926, %v1348, %v1250
        %v1351 = vunpack.c.l.s4 1983009808
        %v1352 = vunpack.c.0.s8 %v1351
        %v1353 = vperm.slane %v1349, %v1352
        %v1354 = vrot.slane %v1353, 4
        %v1355 = vsel %vm926, %v1354, %v1347
        %v1357 = vunpack.c.l.s4 1934713408
        %v1358 = vunpack.c.0.s8 %v1357
        %v1359 = vperm.slane %v1355, %v1358
        %v1360 = vrot.slane %v1359, 4
        %v1361 = vsel %vm926, 0, %v1360
        %v1364 = vpack.i.b16 %v1359, %v1339
        %v1365 = vshrl.u32 %v1339, 16
        %v1366 = vshrl.u32 %v1359, 16
        %v1367 = vpack.i.b16 %v1366, %v1365
        %v1370 = vpack.i.b16 %v1361, %v1341
        %v1371 = vshrl.u32 %v1341, 16
        %v1372 = vshrl.u32 %v1361, 16
        %v1373 = vpack.i.b16 %v1372, %v1371
        %vm1374 = vcmask 64512
        %v1376 = vsel %vm1374, %v968, 0
        %vm1378 = vcmask 1043456
        %v1380 = vsel %vm1378, %v1364, 0
        %1382 = vmatpush.bf16.msra.mxu0 0
        %1383 = vmatpush.bf16.msra.mxu0 0
        %1384 = vmatpush.bf16.msra.mxu0 0
        %1385 = vmatpush.bf16.msra.mxu0 0
        %1386 = vmatpush.bf16.msra.mxu0 0
        %1387 = vmatpush.bf16.msra.mxu0 0
        %1388 = vmatpush.bf16.msra.mxu0 0
        %1389 = vmatpush.bf16.msra.mxu0 %v1380
        %1390 = vmatmul.bf16.gmra.mxu0 %v1376
        %v1391 = vpop.f32.mrf.mxu0
        %v1392 = vadd.f32 %v923, %v1391
        %v1393 = vpop.f32.mrf.mxu0
        %1394 = vdwg.mxu0
        %v1396 = vsel %vm1374, %v971, 0
        %v1399 = vsel %vm1378, %v1367, 0
        %1401 = vmatpush.bf16.msra.mxu0 0
        %1402 = vmatpush.bf16.msra.mxu0 0
        %1403 = vmatpush.bf16.msra.mxu0 0
        %1404 = vmatpush.bf16.msra.mxu0 0
        %1405 = vmatpush.bf16.msra.mxu0 0
        %1406 = vmatpush.bf16.msra.mxu0 0
        %1407 = vmatpush.bf16.msra.mxu0 0
        %1408 = vmatpush.bf16.msra.mxu0 %v1399
        %1409 = vmatmul.bf16.gmra.mxu0 %v1396
        %v1410 = vpop.f32.mrf.mxu0
        %v1411 = vadd.f32 %v923, %v1410
        %v1412 = vpop.f32.mrf.mxu0
        %1413 = vdwg.mxu0
        %v1415 = vsel %vm1374, %v974, 0
        %v1418 = vsel %vm1378, %v1370, 0
        %1420 = vmatpush.bf16.msra.mxu0 0
        %1421 = vmatpush.bf16.msra.mxu0 0
        %1422 = vmatpush.bf16.msra.mxu0 0
        %1423 = vmatpush.bf16.msra.mxu0 0
        %1424 = vmatpush.bf16.msra.mxu0 0
        %1425 = vmatpush.bf16.msra.mxu0 0
        %1426 = vmatpush.bf16.msra.mxu0 0
        %1427 = vmatpush.bf16.msra.mxu0 %v1418
        %1428 = vmatmul.bf16.gmra.mxu0 %v1415
        %v1429 = vpop.f32.mrf.mxu0
        %v1430 = vadd.f32 %v923, %v1429
        %v1431 = vpop.f32.mrf.mxu0
        %1432 = vdwg.mxu0
        %v1434 = vsel %vm1374, %v977, 0
        %v1437 = vsel %vm1378, %v1373, 0
        %1439 = vmatpush.bf16.msra.mxu0 0
        %1440 = vmatpush.bf16.msra.mxu0 0
        %1441 = vmatpush.bf16.msra.mxu0 0
        %1442 = vmatpush.bf16.msra.mxu0 0
        %1443 = vmatpush.bf16.msra.mxu0 0
        %1444 = vmatpush.bf16.msra.mxu0 0
        %1445 = vmatpush.bf16.msra.mxu0 0
        %1446 = vmatpush.bf16.msra.mxu0 %v1437
        %1447 = vmatmul.bf16.gmra.mxu0 %v1434
        %v1448 = vpop.f32.mrf.mxu0
        %v1449 = vadd.f32 %v923, %v1448
        %v1450 = vpop.f32.mrf.mxu0
        %1451 = vdwg.mxu0
        %v1452 = vsel %vm1374, %v1392, -inf
        %1453 = vmax.xlane.f32.xlu0 %v1452
        %v1454 = vpop.xlane.xlu0 %1453
        %v1455 = vsel %vm1374, %v1411, -inf
        %1456 = vmax.xlane.f32.xlu0 %v1455
        %v1457 = vpop.xlane.xlu0 %1456
        %v1458 = vsel %vm1374, %v1430, -inf
        %1459 = vmax.xlane.f32.xlu0 %v1458
        %v1460 = vpop.xlane.xlu0 %1459
        %v1461 = vsel %vm1374, %v1449, -inf
        %1462 = vmax.xlane.f32.xlu0 %v1461
        %v1463 = vpop.xlane.xlu0 %1462
        %v1464 = vsub.f32 %v1392, %v1454
        %v1465 = vsub.f32 %v1411, %v1457
        %v1466 = vsub.f32 %v1430, %v1460
        %v1467 = vsub.f32 %v1449, %v1463
        %v1468 = vmul.f32 %v1464, 1.442695
        %v1469 = vpow.pop %v1468
        %v1470 = vmul.f32 %v1465, 1.442695
        %v1471 = vpow.pop %v1470
        %v1472 = vmul.f32 %v1466, 1.442695
        %v1473 = vpow.pop %v1472
        %v1474 = vmul.f32 %v1467, 1.442695
        %v1475 = vpow.pop %v1474
        %v1476 = vsel %vm1374, %v1469, 0.0
        %1477 = vadd.xlane.f32.xlu0 %v1476
        %v1478 = vpop.xlane.xlu0 %1477
        %v1479 = vsel %vm1374, %v1471, 0.0
        %1480 = vadd.xlane.f32.xlu0 %v1479
        %v1481 = vpop.xlane.xlu0 %1480
        %v1482 = vsel %vm1374, %v1473, 0.0
        %1483 = vadd.xlane.f32.xlu0 %v1482
        %v1484 = vpop.xlane.xlu0 %1483
        %v1485 = vsel %vm1374, %v1475, 0.0
        %1486 = vadd.xlane.f32.xlu0 %v1485
        %v1487 = vpop.xlane.xlu0 %1486
        %v1488 = vrcp.pop %v1478
        %v1489 = vmul.f32 %v1478, %v1488
        %v1490 = vsub.f32 1.0, %v1489
        %v1491 = vmul.f32 %v1488, %v1490
        %v1492 = vadd.f32 %v1488, %v1491
        %vm1493 = vweird.f32 %v1478
        %vm1494 = vweird.f32 %v1488
        %vm1495 = vmor %vm1493, %vm1494
        %v1496 = vsel %vm1495, %v1488, %v1492
        %v1497 = vand.u32 2147483647, %v1478
        %vm1498 = vcmp.eq.f32.partialorder %v1497, 8.507059e+37
        %v1499 = vand.u32 %v1478, 2147483648
        %v1500 = vor.u32 1.1754944e-38, %v1499
        %v1501 = vsel %vm1498, %v1500, %v1496
        %v1502 = vrcp.pop %v1481
        %v1503 = vmul.f32 %v1481, %v1502
        %v1504 = vsub.f32 1.0, %v1503
        %v1505 = vmul.f32 %v1502, %v1504
        %v1506 = vadd.f32 %v1502, %v1505
        %vm1507 = vweird.f32 %v1481
        %vm1508 = vweird.f32 %v1502
        %vm1509 = vmor %vm1507, %vm1508
        %v1510 = vsel %vm1509, %v1502, %v1506
        %v1511 = vand.u32 2147483647, %v1481
        %vm1512 = vcmp.eq.f32.partialorder %v1511, 8.507059e+37
        %v1513 = vand.u32 %v1481, 2147483648
        %v1514 = vor.u32 1.1754944e-38, %v1513
        %v1515 = vsel %vm1512, %v1514, %v1510
        %v1516 = vrcp.pop %v1484
        %v1517 = vmul.f32 %v1484, %v1516
        %v1518 = vsub.f32 1.0, %v1517
        %v1519 = vmul.f32 %v1516, %v1518
        %v1520 = vadd.f32 %v1516, %v1519
        %vm1521 = vweird.f32 %v1484
        %vm1522 = vweird.f32 %v1516
        %vm1523 = vmor %vm1521, %vm1522
        %v1524 = vsel %vm1523, %v1516, %v1520
        %v1525 = vand.u32 2147483647, %v1484
        %vm1526 = vcmp.eq.f32.partialorder %v1525, 8.507059e+37
        %v1527 = vand.u32 %v1484, 2147483648
        %v1528 = vor.u32 1.1754944e-38, %v1527
        %v1529 = vsel %vm1526, %v1528, %v1524
        %v1530 = vrcp.pop %v1487
        %v1531 = vmul.f32 %v1487, %v1530
        %v1532 = vsub.f32 1.0, %v1531
        %v1533 = vmul.f32 %v1530, %v1532
        %v1534 = vadd.f32 %v1530, %v1533
        %vm1535 = vweird.f32 %v1487
        %vm1536 = vweird.f32 %v1530
        %vm1537 = vmor %vm1535, %vm1536
        %v1538 = vsel %vm1537, %v1530, %v1534
        %v1539 = vand.u32 2147483647, %v1487
        %vm1540 = vcmp.eq.f32.partialorder %v1539, 8.507059e+37
        %v1541 = vand.u32 %v1487, 2147483648
        %v1542 = vor.u32 1.1754944e-38, %v1541
        %v1543 = vsel %vm1540, %v1542, %v1538
        %v1544 = vmul.f32 %v1469, %v1501
        %v1545 = vmul.f32 %v1471, %v1515
        %v1546 = vmul.f32 %v1473, %v1529
        %v1547 = vmul.f32 %v1475, %v1543
        %v1548 = vpack.c.bf16 %v1544, %v1544
        %v1549 = vpack.c.bf16 %v1545, %v1545
        %v1550 = vpack.c.bf16 %v1546, %v1546
        %v1551 = vpack.c.bf16 %v1547, %v1547
        %1552 = vxpose.xlu0.c.b16.start [1/8] %v914, 128
        %1553 = vxpose.xlu0.c.b16.cont [2/8] 0, 128
        %1554 = vxpose.xlu0.c.b16.cont [3/8] 0, 128
        %1555 = vxpose.xlu0.c.b16.cont [4/8] 0, 128
        %1556 = vxpose.xlu0.c.b16.cont [5/8] 0, 128
        %1557 = vxpose.xlu0.c.b16.cont [6/8] 0, 128
        %1558 = vxpose.xlu0.c.b16.cont [7/8] 0, 128
        %1559 = vxpose.xlu0.c.b16.end [8/8] 0, 128
        %v1560 = vpop.trf.xlu0
        %v1561 = vpop.trf.xlu0
        %v1562 = vpop.trf.xlu0
        %v1563 = vpop.trf.xlu0
        %v1564 = vpop.trf.xlu0
        %v1565 = vpop.trf.xlu0
        %v1566 = vpop.trf.xlu0
        %v1567 = vpop.trf.xlu0
        %1568 = vxpose.xlu0.c.b16.start [1/8] %v915, 128
        %1569 = vxpose.xlu0.c.b16.cont [2/8] 0, 128
        %1570 = vxpose.xlu0.c.b16.cont [3/8] 0, 128
        %1571 = vxpose.xlu0.c.b16.cont [4/8] 0, 128
        %1572 = vxpose.xlu0.c.b16.cont [5/8] 0, 128
        %1573 = vxpose.xlu0.c.b16.cont [6/8] 0, 128
        %1574 = vxpose.xlu0.c.b16.cont [7/8] 0, 128
        %1575 = vxpose.xlu0.c.b16.end [8/8] 0, 128
        %v1576 = vpop.trf.xlu0
        %v1577 = vpop.trf.xlu0
        %v1578 = vpop.trf.xlu0
        %v1579 = vpop.trf.xlu0
        %v1580 = vpop.trf.xlu0
        %v1581 = vpop.trf.xlu0
        %v1582 = vpop.trf.xlu0
        %v1583 = vpop.trf.xlu0
        %1584 = vxpose.xlu0.c.b16.start [1/8] %v916, 128
        %1585 = vxpose.xlu0.c.b16.cont [2/8] 0, 128
        %1586 = vxpose.xlu0.c.b16.cont [3/8] 0, 128
        %1587 = vxpose.xlu0.c.b16.cont [4/8] 0, 128
        %1588 = vxpose.xlu0.c.b16.cont [5/8] 0, 128
        %1589 = vxpose.xlu0.c.b16.cont [6/8] 0, 128
        %1590 = vxpose.xlu0.c.b16.cont [7/8] 0, 128
        %1591 = vxpose.xlu0.c.b16.end [8/8] 0, 128
        %v1592 = vpop.trf.xlu0
        %v1593 = vpop.trf.xlu0
        %v1594 = vpop.trf.xlu0
        %v1595 = vpop.trf.xlu0
        %v1596 = vpop.trf.xlu0
        %v1597 = vpop.trf.xlu0
        %v1598 = vpop.trf.xlu0
        %v1599 = vpop.trf.xlu0
        %1600 = vxpose.xlu0.c.b16.start [1/8] %v917, 128
        %1601 = vxpose.xlu0.c.b16.cont [2/8] 0, 128
        %1602 = vxpose.xlu0.c.b16.cont [3/8] 0, 128
        %1603 = vxpose.xlu0.c.b16.cont [4/8] 0, 128
        %1604 = vxpose.xlu0.c.b16.cont [5/8] 0, 128
        %1605 = vxpose.xlu0.c.b16.cont [6/8] 0, 128
        %1606 = vxpose.xlu0.c.b16.cont [7/8] 0, 128
        %1607 = vxpose.xlu0.c.b16.end [8/8] 0, 128
        %v1608 = vpop.trf.xlu0
        %v1609 = vpop.trf.xlu0
        %v1610 = vpop.trf.xlu0
        %v1611 = vpop.trf.xlu0
        %v1612 = vpop.trf.xlu0
        %v1613 = vpop.trf.xlu0
        %v1614 = vpop.trf.xlu0
        %v1615 = vpop.trf.xlu0
        %1616 = vxpose.xlu0.c.b16.start [1/8] %v918, 128
        %1617 = vxpose.xlu0.c.b16.cont [2/8] 0, 128
        %1618 = vxpose.xlu0.c.b16.cont [3/8] 0, 128
        %1619 = vxpose.xlu0.c.b16.cont [4/8] 0, 128
        %1620 = vxpose.xlu0.c.b16.cont [5/8] 0, 128
        %1621 = vxpose.xlu0.c.b16.cont [6/8] 0, 128
        %1622 = vxpose.xlu0.c.b16.cont [7/8] 0, 128
        %1623 = vxpose.xlu0.c.b16.end [8/8] 0, 128
        %v1624 = vpop.trf.xlu0
        %v1625 = vpop.trf.xlu0
        %v1626 = vpop.trf.xlu0
        %v1627 = vpop.trf.xlu0
        %v1628 = vpop.trf.xlu0
        %v1629 = vpop.trf.xlu0
        %v1630 = vpop.trf.xlu0
        %v1631 = vpop.trf.xlu0
        %1632 = vxpose.xlu0.c.b16.start [1/8] %v919, 128
        %1633 = vxpose.xlu0.c.b16.cont [2/8] 0, 128
        %1634 = vxpose.xlu0.c.b16.cont [3/8] 0, 128
        %1635 = vxpose.xlu0.c.b16.cont [4/8] 0, 128
        %1636 = vxpose.xlu0.c.b16.cont [5/8] 0, 128
        %1637 = vxpose.xlu0.c.b16.cont [6/8] 0, 128
        %1638 = vxpose.xlu0.c.b16.cont [7/8] 0, 128
        %1639 = vxpose.xlu0.c.b16.end [8/8] 0, 128
        %v1640 = vpop.trf.xlu0
        %v1641 = vpop.trf.xlu0
        %v1642 = vpop.trf.xlu0
        %v1643 = vpop.trf.xlu0
        %v1644 = vpop.trf.xlu0
        %v1645 = vpop.trf.xlu0
        %v1646 = vpop.trf.xlu0
        %v1647 = vpop.trf.xlu0
        %1648 = vxpose.xlu0.c.b16.start [1/8] %v920, 128
        %1649 = vxpose.xlu0.c.b16.cont [2/8] 0, 128
        %1650 = vxpose.xlu0.c.b16.cont [3/8] 0, 128
        %1651 = vxpose.xlu0.c.b16.cont [4/8] 0, 128
        %1652 = vxpose.xlu0.c.b16.cont [5/8] 0, 128
        %1653 = vxpose.xlu0.c.b16.cont [6/8] 0, 128
        %1654 = vxpose.xlu0.c.b16.cont [7/8] 0, 128
        %1655 = vxpose.xlu0.c.b16.end [8/8] 0, 128
        %v1656 = vpop.trf.xlu0
        %v1657 = vpop.trf.xlu0
        %v1658 = vpop.trf.xlu0
        %v1659 = vpop.trf.xlu0
        %v1660 = vpop.trf.xlu0
        %v1661 = vpop.trf.xlu0
        %v1662 = vpop.trf.xlu0
        %v1663 = vpop.trf.xlu0
        %1664 = vxpose.xlu0.c.b16.start [1/8] %v921, 128
        %1665 = vxpose.xlu0.c.b16.cont [2/8] 0, 128
        %1666 = vxpose.xlu0.c.b16.cont [3/8] 0, 128
        %1667 = vxpose.xlu0.c.b16.cont [4/8] 0, 128
        %1668 = vxpose.xlu0.c.b16.cont [5/8] 0, 128
        %1669 = vxpose.xlu0.c.b16.cont [6/8] 0, 128
        %1670 = vxpose.xlu0.c.b16.cont [7/8] 0, 128
        %1671 = vxpose.xlu0.c.b16.end [8/8] 0, 128
        %v1672 = vpop.trf.xlu0
        %v1673 = vpop.trf.xlu0
        %v1674 = vpop.trf.xlu0
        %v1675 = vpop.trf.xlu0
        %v1676 = vpop.trf.xlu0
        %v1677 = vpop.trf.xlu0
        %v1678 = vpop.trf.xlu0
        %v1679 = vpop.trf.xlu0
        %v1680 = vrot.slane %v1624, 4
        %v1681 = vsel %vm926, %v1680, %v1560
        %v1683 = vunpack.c.l.s4 1983009808
        %v1684 = vunpack.c.0.s8 %v1683
        %v1685 = vperm.slane %v1681, %v1684
        %v1686 = vrot.slane %v1656, 4
        %v1687 = vsel %vm926, %v1686, %v1592
        %v1689 = vunpack.c.l.s4 1983009808
        %v1690 = vunpack.c.0.s8 %v1689
        %v1691 = vperm.slane %v1687, %v1690
        %v1692 = vrot.slane %v1691, 4
        %v1693 = vsel %vm926, %v1692, %v1685
        %v1694 = vrot.slane %v1685, 4
        %v1695 = vsel %vm926, %v1691, %v1694
        %v1697 = vunpack.c.l.s4 1934713408
        %v1698 = vunpack.c.0.s8 %v1697
        %v1699 = vperm.slane %v1693, %v1698
        %v1701 = vunpack.c.l.s4 1934713408
        %v1702 = vunpack.c.0.s8 %v1701
        %v1703 = vperm.slane %v1695, %v1702
        %v1704 = vrot.slane %v1699, 4
        %v1705 = vsel %vm926, 0, %v1704
        %v1706 = vrot.slane %v1703, 4
        %v1707 = vsel %vm926, 0, %v1706
        %v1708 = vrot.slane %v1640, 4
        %v1709 = vsel %vm926, %v1708, %v1576
        %v1711 = vunpack.c.l.s4 1983009808
        %v1712 = vunpack.c.0.s8 %v1711
        %v1713 = vperm.slane %v1709, %v1712
        %v1714 = vrot.slane %v1672, 4
        %v1715 = vsel %vm926, %v1714, %v1608
        %v1717 = vunpack.c.l.s4 1983009808
        %v1718 = vunpack.c.0.s8 %v1717
        %v1719 = vperm.slane %v1715, %v1718
        %v1720 = vrot.slane %v1719, 4
        %v1721 = vsel %vm926, %v1720, %v1713
        %v1722 = vrot.slane %v1713, 4
        %v1723 = vsel %vm926, %v1719, %v1722
        %v1725 = vunpack.c.l.s4 1934713408
        %v1726 = vunpack.c.0.s8 %v1725
        %v1727 = vperm.slane %v1721, %v1726
        %v1729 = vunpack.c.l.s4 1934713408
        %v1730 = vunpack.c.0.s8 %v1729
        %v1731 = vperm.slane %v1723, %v1730
        %v1732 = vrot.slane %v1727, 4
        %v1733 = vsel %vm926, 0, %v1732
        %v1734 = vrot.slane %v1731, 4
        %v1735 = vsel %vm926, 0, %v1734
        %v1738 = vpack.i.b16 %v1727, %v1699
        %v1740 = vshrl.u32 %v1699, 16
        %v1741 = vshrl.u32 %v1727, 16
        %v1742 = vpack.i.b16 %v1741, %v1740
        %v1746 = vpack.i.b16 %v1733, %v1705
        %v1748 = vshrl.u32 %v1705, 16
        %v1749 = vshrl.u32 %v1733, 16
        %v1750 = vpack.i.b16 %v1749, %v1748
        %v1754 = vpack.i.b16 %v1731, %v1703
        %v1756 = vshrl.u32 %v1703, 16
        %v1757 = vshrl.u32 %v1731, 16
        %v1758 = vpack.i.b16 %v1757, %v1756
        %v1762 = vpack.i.b16 %v1735, %v1707
        %v1764 = vshrl.u32 %v1707, 16
        %v1765 = vshrl.u32 %v1735, 16
        %v1766 = vpack.i.b16 %v1765, %v1764
        %1768 = vxpose.xlu0.c.b16.start [1/8] %v1738, 128
        %1769 = vxpose.xlu0.c.b16.cont [2/8] 0, 128
        %1770 = vxpose.xlu0.c.b16.cont [3/8] 0, 128
        %1771 = vxpose.xlu0.c.b16.cont [4/8] 0, 128
        %1772 = vxpose.xlu0.c.b16.cont [5/8] 0, 128
        %1773 = vxpose.xlu0.c.b16.cont [6/8] 0, 128
        %1774 = vxpose.xlu0.c.b16.cont [7/8] 0, 128
        %1775 = vxpose.xlu0.c.b16.end [8/8] 0, 128
        %v1776 = vpop.trf.xlu0
        %v1777 = vpop.trf.xlu0
        %v1778 = vpop.trf.xlu0
        %v1779 = vpop.trf.xlu0
        %v1780 = vpop.trf.xlu0
        %v1781 = vpop.trf.xlu0
        %v1782 = vpop.trf.xlu0
        %v1783 = vpop.trf.xlu0
        %1784 = vxpose.xlu0.c.b16.start [1/8] %v1742, 128
        %1785 = vxpose.xlu0.c.b16.cont [2/8] 0, 128
        %1786 = vxpose.xlu0.c.b16.cont [3/8] 0, 128
        %1787 = vxpose.xlu0.c.b16.cont [4/8] 0, 128
        %1788 = vxpose.xlu0.c.b16.cont [5/8] 0, 128
        %1789 = vxpose.xlu0.c.b16.cont [6/8] 0, 128
        %1790 = vxpose.xlu0.c.b16.cont [7/8] 0, 128
        %1791 = vxpose.xlu0.c.b16.end [8/8] 0, 128
        %v1792 = vpop.trf.xlu0
        %v1793 = vpop.trf.xlu0
        %v1794 = vpop.trf.xlu0
        %v1795 = vpop.trf.xlu0
        %v1796 = vpop.trf.xlu0
        %v1797 = vpop.trf.xlu0
        %v1798 = vpop.trf.xlu0
        %v1799 = vpop.trf.xlu0
        %1800 = vxpose.xlu0.c.b16.start [1/8] %v1746, 128
        %1801 = vxpose.xlu0.c.b16.cont [2/8] 0, 128
        %1802 = vxpose.xlu0.c.b16.cont [3/8] 0, 128
        %1803 = vxpose.xlu0.c.b16.cont [4/8] 0, 128
        %1804 = vxpose.xlu0.c.b16.cont [5/8] 0, 128
        %1805 = vxpose.xlu0.c.b16.cont [6/8] 0, 128
        %1806 = vxpose.xlu0.c.b16.cont [7/8] 0, 128
        %1807 = vxpose.xlu0.c.b16.end [8/8] 0, 128
        %v1808 = vpop.trf.xlu0
        %v1809 = vpop.trf.xlu0
        %v1810 = vpop.trf.xlu0
        %v1811 = vpop.trf.xlu0
        %v1812 = vpop.trf.xlu0
        %v1813 = vpop.trf.xlu0
        %v1814 = vpop.trf.xlu0
        %v1815 = vpop.trf.xlu0
        %1816 = vxpose.xlu0.c.b16.start [1/8] %v1750, 128
        %1817 = vxpose.xlu0.c.b16.cont [2/8] 0, 128
        %1818 = vxpose.xlu0.c.b16.cont [3/8] 0, 128
        %1819 = vxpose.xlu0.c.b16.cont [4/8] 0, 128
        %1820 = vxpose.xlu0.c.b16.cont [5/8] 0, 128
        %1821 = vxpose.xlu0.c.b16.cont [6/8] 0, 128
        %1822 = vxpose.xlu0.c.b16.cont [7/8] 0, 128
        %1823 = vxpose.xlu0.c.b16.end [8/8] 0, 128
        %v1824 = vpop.trf.xlu0
        %v1825 = vpop.trf.xlu0
        %v1826 = vpop.trf.xlu0
        %v1827 = vpop.trf.xlu0
        %v1828 = vpop.trf.xlu0
        %v1829 = vpop.trf.xlu0
        %v1830 = vpop.trf.xlu0
        %v1831 = vpop.trf.xlu0
        %1832 = vxpose.xlu0.c.b16.start [1/8] %v1754, 128
        %1833 = vxpose.xlu0.c.b16.cont [2/8] 0, 128
        %1834 = vxpose.xlu0.c.b16.cont [3/8] 0, 128
        %1835 = vxpose.xlu0.c.b16.cont [4/8] 0, 128
        %1836 = vxpose.xlu0.c.b16.cont [5/8] 0, 128
        %1837 = vxpose.xlu0.c.b16.cont [6/8] 0, 128
        %1838 = vxpose.xlu0.c.b16.cont [7/8] 0, 128
        %1839 = vxpose.xlu0.c.b16.end [8/8] 0, 128
        %v1840 = vpop.trf.xlu0
        %v1841 = vpop.trf.xlu0
        %v1842 = vpop.trf.xlu0
        %v1843 = vpop.trf.xlu0
        %v1844 = vpop.trf.xlu0
        %v1845 = vpop.trf.xlu0
        %v1846 = vpop.trf.xlu0
        %v1847 = vpop.trf.xlu0
        %1848 = vxpose.xlu0.c.b16.start [1/8] %v1758, 128
        %1849 = vxpose.xlu0.c.b16.cont [2/8] 0, 128
        %1850 = vxpose.xlu0.c.b16.cont [3/8] 0, 128
        %1851 = vxpose.xlu0.c.b16.cont [4/8] 0, 128
        %1852 = vxpose.xlu0.c.b16.cont [5/8] 0, 128
        %1853 = vxpose.xlu0.c.b16.cont [6/8] 0, 128
        %1854 = vxpose.xlu0.c.b16.cont [7/8] 0, 128
        %1855 = vxpose.xlu0.c.b16.end [8/8] 0, 128
        %v1856 = vpop.trf.xlu0
        %v1857 = vpop.trf.xlu0
        %v1858 = vpop.trf.xlu0
        %v1859 = vpop.trf.xlu0
        %v1860 = vpop.trf.xlu0
        %v1861 = vpop.trf.xlu0
        %v1862 = vpop.trf.xlu0
        %v1863 = vpop.trf.xlu0
        %1864 = vxpose.xlu0.c.b16.start [1/8] %v1762, 128
        %1865 = vxpose.xlu0.c.b16.cont [2/8] 0, 128
        %1866 = vxpose.xlu0.c.b16.cont [3/8] 0, 128
        %1867 = vxpose.xlu0.c.b16.cont [4/8] 0, 128
        %1868 = vxpose.xlu0.c.b16.cont [5/8] 0, 128
        %1869 = vxpose.xlu0.c.b16.cont [6/8] 0, 128
        %1870 = vxpose.xlu0.c.b16.cont [7/8] 0, 128
        %1871 = vxpose.xlu0.c.b16.end [8/8] 0, 128
        %v1872 = vpop.trf.xlu0
        %v1873 = vpop.trf.xlu0
        %v1874 = vpop.trf.xlu0
        %v1875 = vpop.trf.xlu0
        %v1876 = vpop.trf.xlu0
        %v1877 = vpop.trf.xlu0
        %v1878 = vpop.trf.xlu0
        %v1879 = vpop.trf.xlu0
        %1880 = vxpose.xlu0.c.b16.start [1/8] %v1766, 128
        %1881 = vxpose.xlu0.c.b16.cont [2/8] 0, 128
        %1882 = vxpose.xlu0.c.b16.cont [3/8] 0, 128
        %1883 = vxpose.xlu0.c.b16.cont [4/8] 0, 128
        %1884 = vxpose.xlu0.c.b16.cont [5/8] 0, 128
        %1885 = vxpose.xlu0.c.b16.cont [6/8] 0, 128
        %1886 = vxpose.xlu0.c.b16.cont [7/8] 0, 128
        %1887 = vxpose.xlu0.c.b16.end [8/8] 0, 128
        %v1888 = vpop.trf.xlu0
        %v1889 = vpop.trf.xlu0
        %v1890 = vpop.trf.xlu0
        %v1891 = vpop.trf.xlu0
        %v1892 = vpop.trf.xlu0
        %v1893 = vpop.trf.xlu0
        %v1894 = vpop.trf.xlu0
        %v1895 = vpop.trf.xlu0
        %v1896 = vrot.slane %v1840, 4
        %v1897 = vsel %vm926, %v1896, %v1776
        %v1899 = vunpack.c.l.s4 1983009808
        %v1900 = vunpack.c.0.s8 %v1899
        %v1901 = vperm.slane %v1897, %v1900
        %v1902 = vrot.slane %v1872, 4
        %v1903 = vsel %vm926, %v1902, %v1808
        %v1905 = vunpack.c.l.s4 1983009808
        %v1906 = vunpack.c.0.s8 %v1905
        %v1907 = vperm.slane %v1903, %v1906
        %v1908 = vrot.slane %v1907, 4
        %v1909 = vsel %vm926, %v1908, %v1901
        %v1911 = vunpack.c.l.s4 1934713408
        %v1912 = vunpack.c.0.s8 %v1911
        %v1913 = vperm.slane %v1909, %v1912
        %v1914 = vrot.slane %v1913, 4
        %v1915 = vsel %vm926, 0, %v1914
        %v1916 = vrot.slane %v1856, 4
        %v1917 = vsel %vm926, %v1916, %v1792
        %v1919 = vunpack.c.l.s4 1983009808
        %v1920 = vunpack.c.0.s8 %v1919
        %v1921 = vperm.slane %v1917, %v1920
        %v1922 = vrot.slane %v1888, 4
        %v1923 = vsel %vm926, %v1922, %v1824
        %v1925 = vunpack.c.l.s4 1983009808
        %v1926 = vunpack.c.0.s8 %v1925
        %v1927 = vperm.slane %v1923, %v1926
        %v1928 = vrot.slane %v1927, 4
        %v1929 = vsel %vm926, %v1928, %v1921
        %v1931 = vunpack.c.l.s4 1934713408
        %v1932 = vunpack.c.0.s8 %v1931
        %v1933 = vperm.slane %v1929, %v1932
        %v1934 = vrot.slane %v1933, 4
        %v1935 = vsel %vm926, 0, %v1934
        %v1938 = vpack.i.b16 %v1933, %v1913
        %v1939 = vshrl.u32 %v1913, 16
        %v1940 = vshrl.u32 %v1933, 16
        %v1941 = vpack.i.b16 %v1940, %v1939
        %v1944 = vpack.i.b16 %v1935, %v1915
        %v1945 = vshrl.u32 %v1915, 16
        %v1946 = vshrl.u32 %v1935, 16
        %v1947 = vpack.i.b16 %v1946, %v1945
        %v1949 = vsel %vm1374, %v1938, 0
        %v1952 = vsel %vm1374, %v1548, 0
        %1954 = vmatpush.bf16.xpose.msra.mxu0 0
        %1955 = vmatpush.bf16.xpose.msra.mxu0 0
        %1956 = vmatpush.bf16.xpose.msra.mxu0 0
        %1957 = vmatpush.bf16.xpose.msra.mxu0 0
        %1958 = vmatpush.bf16.xpose.msra.mxu0 0
        %1959 = vmatpush.bf16.xpose.msra.mxu0 0
        %1960 = vmatpush.bf16.xpose.msra.mxu0 0
        %1961 = vmatpush.bf16.xpose.msra.mxu0 %v1952
        %1962 = vmatmul.bf16.gmra.mxu0 %v1949
        %v1963 = vpop.f32.mrf.mxu0
        %v1964 = vadd.f32 0.0, %v1963
        %v1965 = vpop.f32.mrf.mxu0
        %1966 = vdwg.mxu0
        %v1968 = vsel %vm1374, %v1941, 0
        %v1971 = vsel %vm1374, %v1549, 0
        %1973 = vmatpush.bf16.xpose.msra.mxu0 0
        %1974 = vmatpush.bf16.xpose.msra.mxu0 0
        %1975 = vmatpush.bf16.xpose.msra.mxu0 0
        %1976 = vmatpush.bf16.xpose.msra.mxu0 0
        %1977 = vmatpush.bf16.xpose.msra.mxu0 0
        %1978 = vmatpush.bf16.xpose.msra.mxu0 0
        %1979 = vmatpush.bf16.xpose.msra.mxu0 0
        %1980 = vmatpush.bf16.xpose.msra.mxu0 %v1971
        %1981 = vmatmul.bf16.gmra.mxu0 %v1968
        %v1982 = vpop.f32.mrf.mxu0
        %v1983 = vadd.f32 0.0, %v1982
        %v1984 = vpop.f32.mrf.mxu0
        %1985 = vdwg.mxu0
        %v1987 = vsel %vm1374, %v1944, 0
        %v1990 = vsel %vm1374, %v1550, 0
        %1992 = vmatpush.bf16.xpose.msra.mxu0 0
        %1993 = vmatpush.bf16.xpose.msra.mxu0 0
        %1994 = vmatpush.bf16.xpose.msra.mxu0 0
        %1995 = vmatpush.bf16.xpose.msra.mxu0 0
        %1996 = vmatpush.bf16.xpose.msra.mxu0 0
        %1997 = vmatpush.bf16.xpose.msra.mxu0 0
        %1998 = vmatpush.bf16.xpose.msra.mxu0 0
        %1999 = vmatpush.bf16.xpose.msra.mxu0 %v1990
        %2000 = vmatmul.bf16.gmra.mxu0 %v1987
        %v2001 = vpop.f32.mrf.mxu0
        %v2002 = vadd.f32 0.0, %v2001
        %v2003 = vpop.f32.mrf.mxu0
        %2004 = vdwg.mxu0
        %v2006 = vsel %vm1374, %v1947, 0
        %v2009 = vsel %vm1374, %v1551, 0
        %2011 = vmatpush.bf16.xpose.msra.mxu0 0
        %2012 = vmatpush.bf16.xpose.msra.mxu0 0
        %2013 = vmatpush.bf16.xpose.msra.mxu0 0
        %2014 = vmatpush.bf16.xpose.msra.mxu0 0
        %2015 = vmatpush.bf16.xpose.msra.mxu0 0
        %2016 = vmatpush.bf16.xpose.msra.mxu0 0
        %2017 = vmatpush.bf16.xpose.msra.mxu0 0
        %2018 = vmatpush.bf16.xpose.msra.mxu0 %v2009
        %2019 = vmatmul.bf16.gmra.mxu0 %v2006
        %v2020 = vpop.f32.mrf.mxu0
        %v2021 = vadd.f32 0.0, %v2020
        %v2022 = vpop.f32.mrf.mxu0
        %2023 = vdwg.mxu0
        %2024 = vxpose.xlu0.b32.start [1/16] %v1964, 128
        %2025 = vxpose.xlu0.b32.cont [2/16] 0.0, 128
        %2026 = vxpose.xlu0.b32.cont [3/16] 0.0, 128
        %2027 = vxpose.xlu0.b32.cont [4/16] 0.0, 128
        %2028 = vxpose.xlu0.b32.cont [5/16] 0.0, 128
        %2029 = vxpose.xlu0.b32.cont [6/16] 0.0, 128
        %2030 = vxpose.xlu0.b32.cont [7/16] 0.0, 128
        %2031 = vxpose.xlu0.b32.cont [8/16] 0.0, 128
        %2032 = vxpose.xlu0.b32.cont [9/16] 0.0, 128
        %2033 = vxpose.xlu0.b32.cont [10/16] 0.0, 128
        %2034 = vxpose.xlu0.b32.cont [11/16] 0.0, 128
        %2035 = vxpose.xlu0.b32.cont [12/16] 0.0, 128
        %2036 = vxpose.xlu0.b32.cont [13/16] 0.0, 128
        %2037 = vxpose.xlu0.b32.cont [14/16] 0.0, 128
        %2038 = vxpose.xlu0.b32.cont [15/16] 0.0, 128
        %2039 = vxpose.xlu0.b32.end [16/16] 0.0, 128
        %v2040 = vpop.trf.xlu0
        %v2041 = vpop.trf.xlu0
        %v2042 = vpop.trf.xlu0
        %v2043 = vpop.trf.xlu0
        %v2044 = vpop.trf.xlu0
        %v2045 = vpop.trf.xlu0
        %v2046 = vpop.trf.xlu0
        %v2047 = vpop.trf.xlu0
        %v2048 = vpop.trf.xlu0
        %v2049 = vpop.trf.xlu0
        %v2050 = vpop.trf.xlu0
        %v2051 = vpop.trf.xlu0
        %v2052 = vpop.trf.xlu0
        %v2053 = vpop.trf.xlu0
        %v2054 = vpop.trf.xlu0
        %v2055 = vpop.trf.xlu0
        %2056 = vxpose.xlu0.b32.start [1/16] %v1983, 128
        %2057 = vxpose.xlu0.b32.cont [2/16] 0.0, 128
        %2058 = vxpose.xlu0.b32.cont [3/16] 0.0, 128
        %2059 = vxpose.xlu0.b32.cont [4/16] 0.0, 128
        %2060 = vxpose.xlu0.b32.cont [5/16] 0.0, 128
        %2061 = vxpose.xlu0.b32.cont [6/16] 0.0, 128
        %2062 = vxpose.xlu0.b32.cont [7/16] 0.0, 128
        %2063 = vxpose.xlu0.b32.cont [8/16] 0.0, 128
        %2064 = vxpose.xlu0.b32.cont [9/16] 0.0, 128
        %2065 = vxpose.xlu0.b32.cont [10/16] 0.0, 128
        %2066 = vxpose.xlu0.b32.cont [11/16] 0.0, 128
        %2067 = vxpose.xlu0.b32.cont [12/16] 0.0, 128
        %2068 = vxpose.xlu0.b32.cont [13/16] 0.0, 128
        %2069 = vxpose.xlu0.b32.cont [14/16] 0.0, 128
        %2070 = vxpose.xlu0.b32.cont [15/16] 0.0, 128
        %2071 = vxpose.xlu0.b32.end [16/16] 0.0, 128
        %v2072 = vpop.trf.xlu0
        %v2073 = vpop.trf.xlu0
        %v2074 = vpop.trf.xlu0
        %v2075 = vpop.trf.xlu0
        %v2076 = vpop.trf.xlu0
        %v2077 = vpop.trf.xlu0
        %v2078 = vpop.trf.xlu0
        %v2079 = vpop.trf.xlu0
        %v2080 = vpop.trf.xlu0
        %v2081 = vpop.trf.xlu0
        %v2082 = vpop.trf.xlu0
        %v2083 = vpop.trf.xlu0
        %v2084 = vpop.trf.xlu0
        %v2085 = vpop.trf.xlu0
        %v2086 = vpop.trf.xlu0
        %v2087 = vpop.trf.xlu0
        %2088 = vxpose.xlu0.b32.start [1/16] %v2002, 128
        %2089 = vxpose.xlu0.b32.cont [2/16] 0.0, 128
        %2090 = vxpose.xlu0.b32.cont [3/16] 0.0, 128
        %2091 = vxpose.xlu0.b32.cont [4/16] 0.0, 128
        %2092 = vxpose.xlu0.b32.cont [5/16] 0.0, 128
        %2093 = vxpose.xlu0.b32.cont [6/16] 0.0, 128
        %2094 = vxpose.xlu0.b32.cont [7/16] 0.0, 128
        %2095 = vxpose.xlu0.b32.cont [8/16] 0.0, 128
        %2096 = vxpose.xlu0.b32.cont [9/16] 0.0, 128
        %2097 = vxpose.xlu0.b32.cont [10/16] 0.0, 128
        %2098 = vxpose.xlu0.b32.cont [11/16] 0.0, 128
        %2099 = vxpose.xlu0.b32.cont [12/16] 0.0, 128
        %2100 = vxpose.xlu0.b32.cont [13/16] 0.0, 128
        %2101 = vxpose.xlu0.b32.cont [14/16] 0.0, 128
        %2102 = vxpose.xlu0.b32.cont [15/16] 0.0, 128
        %2103 = vxpose.xlu0.b32.end [16/16] 0.0, 128
        %v2104 = vpop.trf.xlu0
        %v2105 = vpop.trf.xlu0
        %v2106 = vpop.trf.xlu0
        %v2107 = vpop.trf.xlu0
        %v2108 = vpop.trf.xlu0
        %v2109 = vpop.trf.xlu0
        %v2110 = vpop.trf.xlu0
        %v2111 = vpop.trf.xlu0
        %v2112 = vpop.trf.xlu0
        %v2113 = vpop.trf.xlu0
        %v2114 = vpop.trf.xlu0
        %v2115 = vpop.trf.xlu0
        %v2116 = vpop.trf.xlu0
        %v2117 = vpop.trf.xlu0
        %v2118 = vpop.trf.xlu0
        %v2119 = vpop.trf.xlu0
        %2120 = vxpose.xlu0.b32.start [1/16] %v2021, 128
        %2121 = vxpose.xlu0.b32.cont [2/16] 0.0, 128
        %2122 = vxpose.xlu0.b32.cont [3/16] 0.0, 128
        %2123 = vxpose.xlu0.b32.cont [4/16] 0.0, 128
        %2124 = vxpose.xlu0.b32.cont [5/16] 0.0, 128
        %2125 = vxpose.xlu0.b32.cont [6/16] 0.0, 128
        %2126 = vxpose.xlu0.b32.cont [7/16] 0.0, 128
        %2127 = vxpose.xlu0.b32.cont [8/16] 0.0, 128
        %2128 = vxpose.xlu0.b32.cont [9/16] 0.0, 128
        %2129 = vxpose.xlu0.b32.cont [10/16] 0.0, 128
        %2130 = vxpose.xlu0.b32.cont [11/16] 0.0, 128
        %2131 = vxpose.xlu0.b32.cont [12/16] 0.0, 128
        %2132 = vxpose.xlu0.b32.cont [13/16] 0.0, 128
        %2133 = vxpose.xlu0.b32.cont [14/16] 0.0, 128
        %2134 = vxpose.xlu0.b32.cont [15/16] 0.0, 128
        %2135 = vxpose.xlu0.b32.end [16/16] 0.0, 128
        %v2136 = vpop.trf.xlu0
        %v2137 = vpop.trf.xlu0
        %v2138 = vpop.trf.xlu0
        %v2139 = vpop.trf.xlu0
        %v2140 = vpop.trf.xlu0
        %v2141 = vpop.trf.xlu0
        %v2142 = vpop.trf.xlu0
        %v2143 = vpop.trf.xlu0
        %v2144 = vpop.trf.xlu0
        %v2145 = vpop.trf.xlu0
        %v2146 = vpop.trf.xlu0
        %v2147 = vpop.trf.xlu0
        %v2148 = vpop.trf.xlu0
        %v2149 = vpop.trf.xlu0
        %v2150 = vpop.trf.xlu0
        %v2151 = vpop.trf.xlu0
        %v2152 = vrot.slane %v2104, 4
        %v2153 = vsel %vm710, %v2152, %v2040
        %v2154 = vrot.slane %v2040, 4
        %v2155 = vsel %vm710, %v2104, %v2154
        %v2157 = vunpack.c.l.s4 1983009808
        %v2158 = vunpack.c.0.s8 %v2157
        %v2159 = vperm.slane %v2153, %v2158
        %v2161 = vunpack.c.l.s4 1983009808
        %v2162 = vunpack.c.0.s8 %v2161
        %v2163 = vperm.slane %v2155, %v2162
        %v2164 = vrot.slane %v2136, 4
        %v2165 = vsel %vm710, %v2164, %v2072
        %v2166 = vrot.slane %v2072, 4
        %v2167 = vsel %vm710, %v2136, %v2166
        %v2169 = vunpack.c.l.s4 1983009808
        %v2170 = vunpack.c.0.s8 %v2169
        %v2171 = vperm.slane %v2165, %v2170
        %v2173 = vunpack.c.l.s4 1983009808
        %v2174 = vunpack.c.0.s8 %v2173
        %v2175 = vperm.slane %v2167, %v2174
        %v2176 = vrot.slane %v2171, 4
        %v2177 = vsel %vm710, %v2176, %v2159
        %v2178 = vrot.slane %v2159, 4
        %v2179 = vsel %vm710, %v2171, %v2178
        %v2181 = vunpack.c.l.s4 1934713408
        %v2182 = vunpack.c.0.s8 %v2181
        %v2183 = vperm.slane %v2177, %v2182
        %v2185 = vunpack.c.l.s4 1934713408
        %v2186 = vunpack.c.0.s8 %v2185
        %v2187 = vperm.slane %v2179, %v2186
        %v2188 = vrot.slane %v2175, 4
        %v2189 = vsel %vm710, %v2188, %v2163
        %v2190 = vrot.slane %v2163, 4
        %v2191 = vsel %vm710, %v2175, %v2190
        %v2193 = vunpack.c.l.s4 1934713408
        %v2194 = vunpack.c.0.s8 %v2193
        %v2195 = vperm.slane %v2189, %v2194
        %v2197 = vunpack.c.l.s4 1934713408
        %v2198 = vunpack.c.0.s8 %v2197
        %v2199 = vperm.slane %v2191, %v2198
        %v2200 = vrot.slane %v2183, 4
        %v2201 = vsel %vm710, 0.0, %v2200
        %v2202 = vrot.slane %v2187, 4
        %v2203 = vsel %vm710, 0.0, %v2202
        %v2204 = vrot.slane %v2195, 4
        %v2205 = vsel %vm710, 0.0, %v2204
        %v2206 = vrot.slane %v2199, 4
        %v2207 = vsel %vm710, 0.0, %v2206
        %v2208 = vsel %vm710, %v2202, %v2183
        %v2210 = vunpack.c.l.s4 1983009808
        %v2211 = vunpack.c.0.s8 %v2210
        %v2212 = vperm.slane %v2208, %v2211
        %v2213 = vrot.slane %v2203, 4
        %v2214 = vsel %vm710, %v2213, %v2201
        %v2216 = vunpack.c.l.s4 1983009808
        %v2217 = vunpack.c.0.s8 %v2216
        %v2218 = vperm.slane %v2214, %v2217
        %v2219 = vsel %vm710, %v2206, %v2195
        %v2221 = vunpack.c.l.s4 1983009808
        %v2222 = vunpack.c.0.s8 %v2221
        %v2223 = vperm.slane %v2219, %v2222
        %v2224 = vrot.slane %v2207, 4
        %v2225 = vsel %vm710, %v2224, %v2205
        %v2227 = vunpack.c.l.s4 1983009808
        %v2228 = vunpack.c.0.s8 %v2227
        %v2229 = vperm.slane %v2225, %v2228
        %v2230 = vrot.slane %v2218, 4
        %v2231 = vsel %vm710, %v2230, %v2212
        %v2232 = vrot.slane %v2212, 4
        %v2233 = vsel %vm710, %v2218, %v2232
        %v2235 = vunpack.c.l.s4 1934713408
        %v2236 = vunpack.c.0.s8 %v2235
        %v2237 = vperm.slane %v2231, %v2236
        %v2239 = vunpack.c.l.s4 1934713408
        %v2240 = vunpack.c.0.s8 %v2239
        %v2241 = vperm.slane %v2233, %v2240
        %v2242 = vrot.slane %v2229, 4
        %v2243 = vsel %vm710, %v2242, %v2223
        %v2244 = vrot.slane %v2223, 4
        %v2245 = vsel %vm710, %v2229, %v2244
        %v2247 = vunpack.c.l.s4 1934713408
        %v2248 = vunpack.c.0.s8 %v2247
        %v2249 = vperm.slane %v2243, %v2248
        %v2251 = vunpack.c.l.s4 1934713408
        %v2252 = vunpack.c.0.s8 %v2251
        %v2253 = vperm.slane %v2245, %v2252
        %v2254 = vrot.slane %v2249, 4
        %v2255 = vsel %vm710, %v2254, %v2237
        %v2256 = vrot.slane %v2237, 4
        %v2257 = vsel %vm710, %v2249, %v2256
        %v2258 = vrot.slane %v2253, 4
        %v2259 = vsel %vm710, %v2258, %v2241
        %v2260 = vrot.slane %v2241, 4
        %v2261 = vsel %vm710, %v2253, %v2260
        %2263 = vrot.lane.b32.xlu0 %v2257, 8
        %v2264 = vpop.permute.xlu0 %2263
        %2267 = vrot.lane.b32.xlu0 %v2259, 16
        %v2268 = vpop.permute.xlu0 %2267
        %2271 = vrot.lane.b32.xlu0 %v2261, 24
        %v2272 = vpop.permute.xlu0 %2271
        %v2274 = vsel %vm1374, %v2255, %v2264
        %vm2275 = vcmask 130048
        %v2276 = vsel %vm2275, %v2274, %v2268
        %vm2277 = vcmask 195584
        %v2278 = vsel %vm2277, %v2276, %v2272
        %v2279 = vld [vmem:[#allocation3] sm:$0xff]
        %v2280 = vpack.c.bf16 %v2278, %v2278
        %v2281 = vld [vmem:[#allocation10] sm:$0xf]
        %v2282 = vld [vmem:[#allocation10 + $0x4] sm:$0xf]
        %v2283 = vld [vmem:[#allocation10 + $0x8] sm:$0xf]
        %v2284 = vld [vmem:[#allocation10 + $0xc] sm:$0xf]
        %v2289 = vunpack.c.l.b16 %v2281
        %v2290 = vunpack.c.l.b16 %v2282
        %v2291 = vunpack.c.l.b16 %v2283
        %v2292 = vunpack.c.l.b16 %v2284
        %v2293 = vpack.c.b16 %v2290, %v2289
        %v2294 = vpack.c.b16 %v2292, %v2291
        %v2298 = vsel %vm622, %v2280, 0
        %2300 = vmatpush.bf16.msra.mxu0 0
        %2301 = vmatpush.bf16.msra.mxu0 0
        %2302 = vmatpush.bf16.msra.mxu0 0
        %2303 = vmatpush.bf16.msra.mxu0 0
        %2304 = vmatpush.bf16.msra.mxu0 0
        %2305 = vmatpush.bf16.msra.mxu0 0
        %2306 = vmatpush.bf16.msra.mxu0 %v2294
        %2307 = vmatpush.bf16.msra.mxu0 %v2293
        %2308 = vmatmul.bf16.gmra.mxu0 %v2298
        %v2309 = vpop.f32.mrf.mxu0
        %v2310 = vadd.f32 0.0, %v2309
        %v2311 = vpop.f32.mrf.mxu0
        %2312 = vdwg.mxu0
        %v2313 = vadd.f32 %v2279, %v2310
        %2314 = vst.msk [vmem:[#allocation3] sm:$0xff] %vm622, %v2313
        %v2315 = vld [vmem:[#allocation4] sm:$0xff]
        %v2316 = vsel %vm1374, %v1544, 0.0
        %v2317 = vsel %vm1374, %v1545, 0.0
        %v2318 = vadd.f32 %v2316, %v2317
        %v2319 = vsel %vm1374, %v1546, 0.0
        %v2320 = vadd.f32 %v2318, %v2319
        %v2321 = vsel %vm1374, %v1547, 0.0
        %v2322 = vadd.f32 %v2320, %v2321
        %v2323 = vadd.f32 %v2315, %v2322
        %2324 = vst.msk [vmem:[#allocation4] sm:$0xff] %vm1374, %v2323
        // Predicated region
        $region85: #{tpu_custom_call.1} parent=63 // pred_check
          %p2325 = pneg %p591
        $region86: #{tpu_custom_call.1} parent=63 // pred_check_branch
          %2327 = sbr.rel (%p2325) target = $region88
        $region87: #{tpu_custom_call.1} parent=63 // pred_region
          %v2328 = vld [vmem:[%s10] sm:$0x3f]
          %v2329 = vld [vmem:[%s575] sm:$0xff]
          %v2330 = vld [vmem:[#allocation3] sm:$0xff]
          %v2331 = vperm.slane %v2328, 4
          %v2332 = vadd.f32 %v2330, %v2331
          %v2333 = vadd.f32 %v2329, %v2332
          %v2334 = vsel %vm622, %v2333, 0.0
          %2335 = vadd.xlane.f32.xlu0 %v2334
          %v2336 = vpop.xlane.xlu0 %2335
          %v2337 = vrcp.pop 32.0
          %v2338 = vmul.f32 32.0, %v2337
          %v2339 = vsub.f32 1.0, %v2338
          %v2340 = vmul.f32 %v2337, %v2339
          %v2341 = vadd.f32 %v2337, %v2340
          %vm2342 = vweird.f32 %v2337
          %v2343 = vsel %vm2342, %v2337, %v2341
          %v2344 = vmul.f32 %v2336, %v2343
          %v2345 = vsub.f32 %v2333, %v2344
          %v2346 = vmul.f32 %v2345, %v2345
          %v2347 = vsel %vm622, %v2346, 0.0
          %2348 = vadd.xlane.f32.xlu0 %v2347
          %v2349 = vpop.xlane.xlu0 %2348
          %v2350 = vmul.f32 %v2349, %v2343
          %v2351 = vadd.f32 %v2350, 1e-05
          %v2352 = vrsqrt.pop %v2351
          %v2353 = vmul.f32 %v2352, %v2351
          %v2354 = vmul.f32 %v2353, %v2352
          %v2355 = vmul.f32 0.5, %v2354
          %v2356 = vsub.f32 1.5, %v2355
          %v2357 = vmul.f32 %v2352, %v2356
          %vm2358 = vweird.f32 %v2351
          %vm2359 = vweird.f32 %v2352
          %vm2360 = vmor %vm2358, %vm2359
          %v2361 = vsel %vm2360, %v2352, %v2357
          %v2362 = vmul.f32 %v2345, %v2361
          %v2363 = vperm.slane %v2328, 0
          %v2364 = vmul.f32 %v2362, %v2363
          %v2365 = vperm.slane %v2328, 1
          %v2366 = vadd.f32 %v2364, %v2365
          %v2367 = vpack.c.bf16 %v2366, %v2366
          %v2368 = vld [vmem:[#allocation11] sm:$0xf]
          %v2369 = vld [vmem:[#allocation11 + $0x4] sm:$0xf]
          %v2370 = vld [vmem:[#allocation11 + $0x8] sm:$0xf]
          %v2371 = vld [vmem:[#allocation11 + $0xc] sm:$0xf]
          %v2372 = vld [vmem:[%s8] sm:$0x1]
          %v2374 = vperm.slane %v2372, 0
          %v2380 = vunpack.c.l.b16 %v2368
          %v2381 = vunpack.c.l.b16 %v2369
          %v2382 = vunpack.c.l.b16 %v2370
          %v2383 = vunpack.c.l.b16 %v2371
          %v2384 = vpack.c.b16 %v2381, %v2380
          %v2385 = vpack.c.b16 %v2383, %v2382
          %v2389 = vsel %vm622, %v2367, 0
          %2391 = vmatpush.bf16.msra.mxu0 0
          %2392 = vmatpush.bf16.msra.mxu0 0
          %2393 = vmatpush.bf16.msra.mxu0 0
          %2394 = vmatpush.bf16.msra.mxu0 0
          %2395 = vmatpush.bf16.msra.mxu0 0
          %2396 = vmatpush.bf16.msra.mxu0 0
          %2397 = vmatpush.bf16.msra.mxu0 %v2385
          %2398 = vmatpush.bf16.msra.mxu0 %v2384
          %2399 = vmatmul.bf16.gmra.mxu0 %v2389
          %v2400 = vpop.f32.mrf.mxu0
          %v2401 = vadd.f32 %v2374, %v2400
          %v2402 = vpop.f32.mrf.mxu0
          %2403 = vdwg.mxu0
          %v2404 = vmax.f32 %v2401, 0.0
          %v2405 = vpack.c.bf16 %v2404, %v2404
          %v2406 = vld [vmem:[%s9] sm:$0xf]
          %v2407 = vld [vmem:[%s9 + $0x4] sm:$0xf]
          %v2408 = vld [vmem:[%s9 + $0x8] sm:$0xf]
          %v2409 = vld [vmem:[%s9 + $0xc] sm:$0xf]
          %v2410 = vld [vmem:[%s9 + $0x10] sm:$0xf]
          %v2411 = vld [vmem:[%s9 + $0x14] sm:$0xf]
          %v2412 = vld [vmem:[%s9 + $0x18] sm:$0xf]
          %v2413 = vld [vmem:[%s9 + $0x1c] sm:$0xf]
          %v2414 = vperm.slane %v2328, 5
          %v2423 = vunpack.c.l.b16 %v2406
          %v2424 = vunpack.c.l.b16 %v2407
          %v2425 = vunpack.c.l.b16 %v2408
          %v2426 = vunpack.c.l.b16 %v2409
          %v2427 = vunpack.c.l.b16 %v2410
          %v2428 = vunpack.c.l.b16 %v2411
          %v2429 = vunpack.c.l.b16 %v2412
          %v2430 = vunpack.c.l.b16 %v2413
          %v2431 = vpack.c.b16 %v2424, %v2423
          %v2432 = vpack.c.b16 %v2426, %v2425
          %v2433 = vpack.c.b16 %v2428, %v2427
          %v2434 = vpack.c.b16 %v2430, %v2429
          %vm2439 = vcmask 523264
          %v2441 = vsel %vm2439, %v2405, 0
          %2443 = vmatpush.bf16.msra.mxu0 0
          %2444 = vmatpush.bf16.msra.mxu0 0
          %2445 = vmatpush.bf16.msra.mxu0 0
          %2446 = vmatpush.bf16.msra.mxu0 0
          %2447 = vmatpush.bf16.msra.mxu0 %v2434
          %2448 = vmatpush.bf16.msra.mxu0 %v2433
          %2449 = vmatpush.bf16.msra.mxu0 %v2432
          %2450 = vmatpush.bf16.msra.mxu0 %v2431
          %2451 = vmatmul.bf16.gmra.mxu0 %v2441
          %v2452 = vpop.f32.mrf.mxu0
          %v2453 = vadd.f32 %v2414, %v2452
          %v2454 = vpop.f32.mrf.mxu0
          %2455 = vdwg.mxu0
          %v2456 = vadd.f32 %v2366, %v2453
          %v2457 = vsel %vm622, %v2456, 0.0
          %2458 = vadd.xlane.f32.xlu0 %v2457
          %v2459 = vpop.xlane.xlu0 %2458
          %v2460 = vmul.f32 %v2459, %v2343
          %v2461 = vsub.f32 %v2456, %v2460
          %v2462 = vmul.f32 %v2461, %v2461
          %v2463 = vsel %vm622, %v2462, 0.0
          %2464 = vadd.xlane.f32.xlu0 %v2463
          %v2465 = vpop.xlane.xlu0 %2464
          %v2466 = vmul.f32 %v2465, %v2343
          %v2467 = vadd.f32 %v2466, 1e-05
          %v2468 = vrsqrt.pop %v2467
          %v2469 = vmul.f32 %v2468, %v2467
          %v2470 = vmul.f32 %v2469, %v2468
          %v2471 = vmul.f32 0.5, %v2470
          %v2472 = vsub.f32 1.5, %v2471
          %v2473 = vmul.f32 %v2468, %v2472
          %vm2474 = vweird.f32 %v2467
          %vm2475 = vweird.f32 %v2468
          %vm2476 = vmor %vm2474, %vm2475
          %v2477 = vsel %vm2476, %v2468, %v2473
          %v2478 = vmul.f32 %v2461, %v2477
          %v2479 = vperm.slane %v2328, 2
          %v2480 = vmul.f32 %v2478, %v2479
          %v2481 = vperm.slane %v2328, 3
          %v2482 = vadd.f32 %v2480, %v2481
          %2483 = vst.msk [vmem:[%s564] sm:$0xff] %vm622, %v2482
          %v2484 = vld [vmem:[#allocation4] sm:$0xff]
          %v2485 = vmul.f32 %v2484, 0.25
          %2486 = vst [vmem:[%s571] sm:$0xff] %v2485
        $region88: #{tpu_custom_call.1} parent=63 // pred_fallthru
          _
        %s2487 = sand.u32 %s321, 1
        %s2488 = scalar_lea.sflag [#allocation7], %s2487
        %s2489 = sand.u32 %s321, 1
        %s2490 = smul.addr %s2489, 8
        %s2491 = scalar_lea.vmem [#allocation13], %s2490
        %s2492 = sand.u32 %s347, 1
        %s2493 = scalar_lea.sflag [#allocation15], %s2492
        %s2494 = sand.u32 %s347, 1
        %s2495 = smul.addr %s2494, 8
        %s2496 = scalar_lea.vmem [#allocation14], %s2495
        // Predicated region
        $region89: #{tpu_custom_call.1} parent=63 // pred_check
          %p2497 = pneg %p331
        $region90: #{tpu_custom_call.1} parent=63 // pred_check_branch
          %2499 = sbr.rel (%p2497) target = $region92
        $region91: #{tpu_custom_call.1} parent=63 // pred_region
          %2501 = vsyncadd %s2488, 0
          %s2502 = smul.addr %s39, 8
          %s2503 = scalar_lea.hbm %s11, %s2502
          %s2505 = sshll.u32 %s2491, 4
          %s2506 = int_to_ptr.vmem [resolvable:$true] %s2505
          %s2507 = sshll.u32 %s2503, 4
          %s2508 = int_to_ptr.hbm [resolvable:$true] %s2507
          %2510 = dma.vmem_to_hbm [thread:$0]  %s2506, 128, %s2508, %s2488
        $region92: #{tpu_custom_call.1} parent=63 // pred_fallthru
          _
        // Predicated region
        $region93: #{tpu_custom_call.1} parent=63 // pred_check
          %p2511 = pneg %p357
        $region94: #{tpu_custom_call.1} parent=63 // pred_check_branch
          %2513 = sbr.rel (%p2511) target = $region96
        $region95: #{tpu_custom_call.1} parent=63 // pred_region
          %2515 = vsyncadd %s2493, 0
          %s2516 = smul.addr %s39, 8
          %s2517 = scalar_lea.hbm %s12, %s2516
          %s2519 = sshll.u32 %s2496, 4
          %s2520 = int_to_ptr.vmem [resolvable:$true] %s2519
          %s2521 = sshll.u32 %s2517, 4
          %s2522 = int_to_ptr.hbm [resolvable:$true] %s2521
          %2524 = dma.vmem_to_hbm [thread:$0]  %s2520, 128, %s2522, %s2493
        $region96: #{tpu_custom_call.1} parent=63 // pred_fallthru
          _
      $region64: #{tpu_custom_call.1} parent=5 // pred_fallthru
        _
      %p2525 = scmp.le.s32.totalorder 2, %s30
      // Predicated region
      $region97: #{tpu_custom_call.1} parent=5 // pred_check
        %p2526 = pneg %p2525
      $region98: #{tpu_custom_call.1} parent=5 // pred_check_branch
        %2528 = sbr.rel (%p2526) target = $region100
      $region99: #{tpu_custom_call.1} parent=5 // pred_region
        %s2529 = ssub.s32 %s30, 2
        // Predicated region
        $region101: #{tpu_custom_call.1} parent=99 // pred_check
          %p2530 = pneg %p337
        $region102: #{tpu_custom_call.1} parent=99 // pred_check_branch
          %2532 = sbr.rel (%p2530) target = $region104
        $region103: #{tpu_custom_call.1} parent=99 // pred_region
          %s2533 = sand.u32 %s322, 1
          %s2534 = scalar_lea.sflag [#allocation7], %s2533
          %s2535 = sand.u32 %s322, 1
          %s2536 = smul.addr %s2535, 8
          %s2537 = scalar_lea.vmem [#allocation13], %s2536
          %2539 = dma.done %s2534, 128
        $region104: #{tpu_custom_call.1} parent=99 // pred_fallthru
          _
        // Predicated region
        $region105: #{tpu_custom_call.1} parent=99 // pred_check
          %p2540 = pneg %p363
        $region106: #{tpu_custom_call.1} parent=99 // pred_check_branch
          %2542 = sbr.rel (%p2540) target = $region108
        $region107: #{tpu_custom_call.1} parent=99 // pred_region
          %s2543 = sand.u32 %s348, 1
          %s2544 = scalar_lea.sflag [#allocation15], %s2543
          %s2545 = sand.u32 %s348, 1
          %s2546 = smul.addr %s2545, 8
          %s2547 = scalar_lea.vmem [#allocation14], %s2546
          %2549 = dma.done %s2544, 128
        $region108: #{tpu_custom_call.1} parent=99 // pred_fallthru
          _
      $region100: #{tpu_custom_call.1} parent=5 // pred_fallthru
        _
    $region6: #{tpu_custom_call.1} parent=1 // loop_footer
      %s34 = sadd.s32 1, %s30
    $region7: #{tpu_custom_call.1} parent=1 // loop_footer_branch
      %29 = sbr.rel target = $region3
    $region8: #{tpu_custom_call.1} parent=1 // loop_exit
      _
    %2550 = vsyncpa [#allocation6], 1
    %s2551 = scalar_lea.sflag [#allocation6], 1
    %2552 = vsyncpa %s2551, 1
    %2553 = vsyncpa [#allocation9], 1
    %2554 = vsyncpa [#allocation12], 1
    %2555 = vsyncpa [#allocation7], 1
    %s2556 = scalar_lea.sflag [#allocation7], 1
    %2557 = vsyncpa %s2556, 1
    %2558 = vsyncpa [#allocation15], 1
    %s2559 = scalar_lea.sflag [#allocation15], 1
    %2560 = vsyncpa %s2559, 1

</llo_original>
